<compile_context>
chip_gen: v7x
topology: tpu7x:2x2x1
jax: 0.10.0
libtpu: 0.0.40
codegen_flags: <defaults>
</compile_context>

<pallas_src>
import functools
import math

import jax
import jax.numpy as jnp
from jax.experimental import pallas as pl
from jax.experimental.pallas import tpu as pltpu

EPS = 1e-7          # float32 eps used by the Lorentzian manifold
MAX_NORM = 1000.0   # torch.renorm max norm used in manifold.normalize
MIN_CLAMP = 1e-6    # clamp inside exp-map norm
LANE = 128
SUBLANE = 8


def _round_up(a, b):
    return (a + b - 1) // b * b


def _arcosh(z):
    z = jnp.maximum(z, 1.0 + EPS)
    return jnp.log(z + jnp.sqrt(z * z - 1.0))


# ----------------------- kernel 1: LorentzLinear (manifold.matvec_regular) ---

def _lorentz_linear_kernel(x_ref, w_ref, b_ref, tmask_ref, h_ref, *, c):
    """h = expmap0(proj_tan0(logmap0(x)_tail @ W^T + b)) on the Lorentz manifold.

    w_ref is zero padded: row 0 (head input) and column 0 (head output) are zero and all
    columns >= out_features are zero, so the head column of the tangent is exactly 0
    (proj_tan0 becomes a no-op) and padded lanes of h stay exactly 0.
    """
    sqrt_c = math.sqrt(c)
    inv_sqrt_c = 1.0 / sqrt_c

    x = x_ref[...]                                   # (tile_n, d_in) f32
    tmask = tmask_ref[...]                           # (1, d_in): 0 on the head column, 1 on the tail
    x0 = x[:, 0:1]                                   # Lorentz "time" coordinate

    # --- logmap0, closed form at the origin (tangent head coordinate == 0) ---
    tail_sq = jnp.sum(x * x * tmask, axis=-1, keepdims=True)       # ||x_tail||^2 (no cancellation)
    dist = sqrt_c * _arcosh(x0 * inv_sqrt_c + EPS)
    scale = dist * jax.lax.rsqrt(tail_sq + EPS)                    # EUP rsqrt, no divide

    # --- tangent-space linear map: one MXU matmul (head/pad columns of mx stay exactly 0) ---
    mx = jnp.dot(scale * x, w_ref[...], preferred_element_type=jnp.float32,
                 precision=jax.lax.Precision.HIGHEST) + b_ref[...]  # (tile_n, d_pad)
    # proj_tan0 is a no-op here: column 0 of mx is exactly 0 by construction.

    # --- expmap0, closed form at the origin ---
    u_sq = jnp.sum(mx * mx, axis=-1, keepdims=True)                # == ||tangent tail||^2
    u_clamped = jnp.maximum(u_sq + EPS, MIN_CLAMP)
    u_norm = jnp.sqrt(u_clamped)
    inv_norm = jax.lax.rsqrt(u_clamped)
    arg = jnp.minimum(u_norm, 50.0) * inv_sqrt_c
    e_pos = jnp.exp(arg)                                           # two EUP exps (EUP slot has slack);
    e_neg = jnp.exp(-arg)                                          # exact, unlike approx reciprocal
    sinh = 0.5 * (e_pos - e_neg)
    tail_scale = sqrt_c * sinh * inv_norm                          # tail = tail_scale * mx_tail

    # --- manifold.normalize: renorm tail to MAX_NORM, head = sqrt(c + ||tail||^2) ---
    tail_norm = tail_scale * jnp.sqrt(u_sq)
    renorm = jnp.where(tail_norm > MAX_NORM, MAX_NORM / (tail_norm + EPS), 1.0)
    new_tail_norm = tail_norm * renorm
    head = jnp.sqrt(c + new_tail_norm * new_tail_norm)

    # (1, d_pad) column mask instead of a full (tile_n, d_pad) iota.
    head_col = jax.lax.broadcasted_iota(jnp.int32, (1, h_ref.shape[-1]), 1) == 0
    h = jnp.where(head_col, head, (tail_scale * renorm) * mx)

    # torch parity: rows whose *tangent* is exactly all-zero map to 0, not to the origin.
    nonzero = jnp.sum(jnp.abs(mx), axis=-1, keepdims=True) > 0.0
    h_ref[...] = jnp.where(nonzero, h, 0.0)


# ----------------------- kernel 2: sparse squared-distance edge attention ----

def _edge_sqdis_att_kernel(rows_ref, cols_ref, h_ref, metric_ref, out_ref, *, c, tile_e):
    """Per-edge Lorentz inner product via direct row gather from a VMEM-resident h.

    rows_ref / cols_ref are SMEM scalar-prefetch refs over the full (e_pad,) index arrays;
    h_ref is the full (n_pad, d_pad) node-feature block (same block every grid step, so it is
    DMA'd into VMEM only once); out_ref is a lane-dense (1, 1, tile_e) block.
    """
    base = pl.program_id(0) * tile_e
    metric = metric_ref[...]                                        # (1, d_pad)
    lane_ids = jax.lax.broadcasted_iota(jnp.int32, (1, tile_e), 1)  # hoisted out of the edge loop

    def body(j, acc):
        r = rows_ref[base + j]                                      # SMEM scalar reads
        s = cols_ref[base + j]
        hx = h_ref[pl.ds(r, 1), :]                                  # (1, d_pad) dynamic row loads
        hy = h_ref[pl.ds(s, 1), :]
        l = jnp.sum(hx * hy * metric, axis=-1, keepdims=True)       # (1, 1) metric mul + lane reduce
        return jnp.where(lane_ids == j, l, acc)

    l_inner = jax.lax.fori_loop(0, tile_e, body,
                                jnp.zeros((1, tile_e), jnp.float32), unroll=8)
    res = jnp.clip(-(c + l_inner), 1e-10, 1.0)
    out_ref[...] = jnp.exp(-res)[None]                              # (1, 1, tile_e) lane-dense store


# ----------------------- wrapper ----------------------------------------------

def lorentz_sparse_sqdis_att(x, edge_index, adj_size, weight, bias, c=1.0,
                             *, edge_tile=256, lin_node_tile=1024, interpret=False):
    """Pallas forward of LorentzSparseSqDisAtt.

    x:          (N, in_features) points on the Lorentz hyperboloid (head coordinate first).
    edge_index: (2, E) int32 COO indices of the sparse adjacency (== adj._indices()).
    adj_size:   (N, N) tuple (== adj.size()), passed through.
    weight:     (in_features, in_features - 1) LorentzLinear weight (out_features = in_features + 1).
    bias:       (in_features,) LorentzLinear bias.
    Returns (edge_index, res, adj_size) with res: (E,) per-edge attention values.
    """
    n, d_in = x.shape
    d_out = d_in + 1
    d_pad = _round_up(d_out, LANE)                     # lane-dense padded feature width
    c = float(c)

    # --- kernel 1: node-axis padding / tiling (HBM-write-bound -> large tiles) ---
    n_pad = _round_up(n, SUBLANE)
    tile_n = n_pad if n_pad <= lin_node_tile else lin_node_tile
    n_pad = _round_up(n_pad, tile_n)
    x_p = jnp.zeros((n_pad, d_in), jnp.float32).at[:n].set(x.astype(jnp.float32))

    # Zero-padded weight / bias: row 0 and column 0 zero (head in/out), columns >= d_out zero.
    w_p = jnp.zeros((d_in, d_pad), jnp.float32).at[1:, 1:d_out].set(weight.T.astype(jnp.float32))
    b_p = jnp.zeros((1, d_pad), jnp.float32).at[0, 1:d_out].set(bias.astype(jnp.float32))
    # Tail mask over the *input* features (0 on the head column).
    tmask = jnp.zeros((1, d_in), jnp.float32).at[0, 1:].set(1.0)

    h = pl.pallas_call(
        functools.partial(_lorentz_linear_kernel, c=c),
        out_shape=jax.ShapeDtypeStruct((n_pad, d_pad), jnp.float32),
        grid=(n_pad // tile_n,),
        in_specs=[
            pl.BlockSpec((tile_n, d_in), lambda i: (i, 0)),
            pl.BlockSpec((d_in, d_pad), lambda i: (0, 0)),
            pl.BlockSpec((1, d_pad), lambda i: (0, 0)),
            pl.BlockSpec((1, d_in), lambda i: (0, 0)),
        ],
        out_specs=pl.BlockSpec((tile_n, d_pad), lambda i: (i, 0)),
        compiler_params=pltpu.CompilerParams(
            dimension_semantics=("parallel",),
            vmem_limit_bytes=32 * 1024 * 1024),
        cost_estimate=pl.CostEstimate(
            flops=2 * n_pad * d_in * d_pad,
            transcendentals=4 * n_pad,
            bytes_accessed=4 * (n_pad * d_in + d_in * d_pad + n_pad * d_pad)),
        interpret=interpret,
    )(x_p, w_p, b_p, tmask)

    # --- kernel 2: edge-axis padding / tiling ---
    e = int(edge_index.shape[1])
    tile_e = edge_tile
    e_pad = _round_up(max(e, 1), tile_e)
    n_edge_tiles = e_pad // tile_e
    rows = jnp.zeros((e_pad,), jnp.int32).at[:e].set(edge_index[0].astype(jnp.int32))
    cols = jnp.zeros((e_pad,), jnp.int32).at[:e].set(edge_index[1].astype(jnp.int32))

    # Lorentz metric row over the transformed features, with the module's truncation quirk:
    # d = in_features - 1 is taken BEFORE the linear, so the last real tail column (index d_in)
    # is excluded; padded lanes are 0 as well.
    metric = (jnp.zeros((1, d_pad), jnp.float32)
              .at[0, 0].set(-1.0)
              .at[0, 1:d_in].set(1.0))

    # TODO(synk): for graphs where h (n_pad * d_pad * 4 bytes) no longer fits in VMEM, switch
    # kernel 2 to an HBM-resident h (memory_space=pl.ANY) with a manual DMA row gather.
    res = pl.pallas_call(
        functools.partial(_edge_sqdis_att_kernel, c=c, tile_e=tile_e),
        out_shape=jax.ShapeDtypeStruct((n_edge_tiles, 1, tile_e), jnp.float32),
        grid_spec=pltpu.PrefetchScalarGridSpec(
            num_scalar_prefetch=2,
            grid=(n_edge_tiles,),
            in_specs=[
                pl.BlockSpec((n_pad, d_pad), lambda i, rows, cols: (0, 0)),  # h resident in VMEM
                pl.BlockSpec((1, d_pad), lambda i, rows, cols: (0, 0)),
            ],
            out_specs=pl.BlockSpec((1, 1, tile_e), lambda i, rows, cols: (i, 0, 0)),
        ),
        compiler_params=pltpu.CompilerParams(
            dimension_semantics=("parallel",),
            vmem_limit_bytes=32 * 1024 * 1024),
        cost_estimate=pl.CostEstimate(
            flops=3 * e_pad * d_pad,
            transcendentals=e_pad,
            bytes_accessed=4 * (n_pad * d_pad + d_pad + 3 * e_pad)),
        interpret=interpret,
    )(rows, cols, h, metric)

    return edge_index, res.reshape(-1)[:e], adj_size


# ----------------------- pure-JAX reference (module-faithful) -----------------

def _reference(x, rows, cols, weight, bias, c):
    c = float(c)
    sqrt_c = math.sqrt(c)
    n, d_in = x.shape
    d = d_in - 1
    x0, x_tail = x[:, :1], x[:, 1:]
    # manifold.log_map_zero
    dist = sqrt_c * jnp.arccosh(jnp.maximum(x0 / sqrt_c + EPS, 1.0 + EPS))
    x_tan_tail = dist / jnp.sqrt(jnp.sum(x_tail * x_tail, -1, keepdims=True) + EPS) * x_tail
    # tangent-space linear map (tangent head stays 0)
    mx_tail = jnp.dot(x_tan_tail, weight.T, precision=jax.lax.Precision.HIGHEST) + bias
    mx = jnp.concatenate([jnp.zeros((n, 1), x.dtype), mx_tail], axis=1)
    # manifold.exp_map_zero
    u_sq = jnp.sum(mx * mx, -1, keepdims=True)
    u_norm = jnp.sqrt(jnp.maximum(u_sq + EPS, MIN_CLAMP))
    arg = jnp.minimum(u_norm, 50.0) / sqrt_c
    h_head = sqrt_c * jnp.cosh(arg)
    h_tail = sqrt_c * jnp.sinh(arg) / u_norm * mx[:, 1:]
    # manifold.normalize
    tn = jnp.sqrt(jnp.sum(h_tail * h_tail, -1, keepdims=True))
    sc = jnp.where(tn > MAX_NORM, MAX_NORM / (tn + EPS), 1.0)
    h_tail = h_tail * sc
    h_head = jnp.sqrt(c + jnp.sum(h_tail * h_tail, -1, keepdims=True))
    h = jnp.concatenate([h_head, h_tail], axis=1)
    h = jnp.where(jnp.sum(jnp.abs(mx), -1, keepdims=True) > 0, h, 0.0)
    # edge attention (module quirk: only the first d tail columns are used)
    hx, hy = h[rows], h[cols]
    l = -hx[:, 0] * hy[:, 0] + jnp.sum(hx[:, 1:1 + d] * hy[:, 1:1 + d], axis=-1)
    return jnp.exp(-jnp.clip(-(c + l), 1e-10, 1.0))


# ----------------------- demo --------------------------------------------------

if __name__ == "__main__":
    key = jax.random.PRNGKey(0)
    k_tail, k_w, k_r, k_c = jax.random.split(key, 4)

    N = 64               # graph nodes
    in_features = 16     # Lorentz dim: head + 15 spatial coords
    E = 200              # number of sparse adjacency entries (COO)
    c = 1.0

    # Points on the hyperboloid: head = sqrt(c + ||tail||^2).
    tail = 0.5 * jax.random.normal(k_tail, (N, in_features - 1), jnp.float32)
    head = jnp.sqrt(c + jnp.sum(tail * tail, axis=-1, keepdims=True))
    x = jnp.concatenate([head, tail], axis=-1)

    # Sparse COO adjacency indices (== adj._indices() in torch).
    rows = jax.random.randint(k_r, (E,), 0, N, dtype=jnp.int32)
    cols = jax.random.randint(k_c, (E,), 0, N, dtype=jnp.int32)
    edge_index = jnp.stack([rows, cols])

    # LorentzLinear(in_features, in_features + 1): weight (out-1, in-1) xavier_uniform(gain=sqrt(2)),
    # bias zeros (reset_parameters).
    fan_out, fan_in = in_features, in_features - 1
    bound = math.sqrt(2.0) * math.sqrt(6.0 / (fan_in + fan_out))
    weight = jax.random.uniform(k_w, (fan_out, fan_in), jnp.float32, -bound, bound)
    bias = jnp.zeros((fan_out,), jnp.float32)
    # TODO(synk): F.dropout on the weight is a no-op in eval mode and is not modeled here.

    index_out, res, size_out = lorentz_sparse_sqdis_att(x, edge_index, (N, N), weight, bias, c)
    res = jax.block_until_ready(res)

    ref = _reference(x, rows, cols, weight, bias, c)
    assert res.shape == (E,)
    assert bool(jnp.all(jnp.isfinite(res)))
    assert bool(jnp.max(jnp.abs(res - ref)) < 5e-2), float(jnp.max(jnp.abs(res - ref)))
    print("KERNEL_OK")
</pallas_src>

<mosaic_0001>
module attributes {stable_mosaic.version = 11 : i64} {
  func.func @_lorentz_linear_kernel(%arg0: i32, %arg1: memref<64x16xf32, #tpu.memory_space<vmem>>, %arg2: memref<16x128xf32, #tpu.memory_space<vmem>>, %arg3: memref<1x128xf32, #tpu.memory_space<vmem>>, %arg4: memref<1x16xf32, #tpu.memory_space<vmem>>, %arg5: memref<64x128xf32, #tpu.memory_space<vmem>>) attributes {dimension_semantics = [#tpu.dimension_semantics<parallel>], iteration_bounds = array<i64: 1>, scalar_prefetch = 0 : i64, scratch_operands = 0 : i64, tpu.core_type = #tpu.core_type<tc>, window_params = [{transform_indices = @transform_0, window_bounds = array<i64: 64, 16>}, {pipeline_mode = #tpu.pipeline_mode<synchronous>, transform_indices = @transform_1, window_bounds = array<i64: 16, 128>}, {pipeline_mode = #tpu.pipeline_mode<synchronous>, transform_indices = @transform_2, window_bounds = array<i64: 1, 128>}, {pipeline_mode = #tpu.pipeline_mode<synchronous>, transform_indices = @transform_3, window_bounds = array<i64: 1, 16>}, {transform_indices = @transform_4, window_bounds = array<i64: 64, 128>}]} {
    %c0 = arith.constant 0 : index
    %c0_0 = arith.constant 0 : index
    %0 = vector.load %arg1[%c0, %c0_0] : memref<64x16xf32, #tpu.memory_space<vmem>>, vector<64x16xf32>
    %c0_1 = arith.constant 0 : index
    %c0_2 = arith.constant 0 : index
    %1 = vector.load %arg4[%c0_1, %c0_2] : memref<1x16xf32, #tpu.memory_space<vmem>>, vector<1x16xf32>
    %2 = vector.extract_strided_slice %0 {offsets = [0, 0], sizes = [64, 1], strides = [1, 1]} : vector<64x16xf32> to vector<64x1xf32>
    %3 = arith.mulf %0, %0 : vector<64x16xf32>
    %4 = vector.broadcast %1 : vector<1x16xf32> to vector<64x16xf32>
    %5 = arith.mulf %3, %4 : vector<64x16xf32>
    %cst = arith.constant dense<0.000000e+00> : vector<64xf32>
    %6 = vector.multi_reduction <add>, %5, %cst [1] : vector<64x16xf32> to vector<64xf32>
    %7 = vector.shape_cast %6 : vector<64xf32> to vector<64x1xf32>
    %cst_3 = arith.constant 1.000000e+00 : f32
    %8 = vector.broadcast %cst_3 : f32 to vector<64x1xf32>
    %9 = arith.mulf %2, %8 : vector<64x1xf32>
    %cst_4 = arith.constant 1.000000e-07 : f32
    %10 = vector.broadcast %cst_4 : f32 to vector<64x1xf32>
    %11 = arith.addf %9, %10 : vector<64x1xf32>
    %cst_5 = arith.constant 1.00000012 : f32
    %12 = vector.broadcast %cst_5 : f32 to vector<64x1xf32>
    %13 = arith.maximumf %11, %12 : vector<64x1xf32>
    %14 = arith.mulf %13, %13 : vector<64x1xf32>
    %cst_6 = arith.constant 1.000000e+00 : f32
    %15 = vector.broadcast %cst_6 : f32 to vector<64x1xf32>
    %16 = arith.subf %14, %15 : vector<64x1xf32>
    %17 = math.sqrt %16 : vector<64x1xf32>
    %18 = arith.addf %13, %17 : vector<64x1xf32>
    %19 = math.log %18 : vector<64x1xf32>
    %cst_7 = arith.constant 1.000000e+00 : f32
    %20 = vector.broadcast %cst_7 : f32 to vector<64x1xf32>
    %21 = arith.mulf %20, %19 : vector<64x1xf32>
    %cst_8 = arith.constant 1.000000e-07 : f32
    %22 = vector.broadcast %cst_8 : f32 to vector<64x1xf32>
    %23 = arith.addf %7, %22 : vector<64x1xf32>
    %24 = math.rsqrt %23 : vector<64x1xf32>
    %25 = arith.mulf %21, %24 : vector<64x1xf32>
    %26 = vector.broadcast %25 : vector<64x1xf32> to vector<64x16xf32>
    %27 = arith.mulf %26, %0 : vector<64x16xf32>
    %c0_9 = arith.constant 0 : index
    %c0_10 = arith.constant 0 : index
    %28 = vector.load %arg2[%c0_9, %c0_10] : memref<16x128xf32, #tpu.memory_space<vmem>>, vector<16x128xf32>
    %cst_11 = arith.constant dense<0.000000e+00> : vector<64x128xf32>
    %29 = tpu.matmul %27, %28, %cst_11 {dimension_numbers = #tpu.dot_dimension_numbers<[1], [0], [0], [1], [0, 0, 1, 1], [], []>, precision = #tpu.contract_precision<fp32>} : vector<64x16xf32>, vector<16x128xf32>, vector<64x128xf32> -> vector<64x128xf32>
    %c0_12 = arith.constant 0 : index
    %c0_13 = arith.constant 0 : index
    %30 = vector.load %arg3[%c0_12, %c0_13] : memref<1x128xf32, #tpu.memory_space<vmem>>, vector<1x128xf32>
    %31 = vector.broadcast %30 : vector<1x128xf32> to vector<64x128xf32>
    %32 = arith.addf %29, %31 : vector<64x128xf32>
    %33 = arith.mulf %32, %32 : vector<64x128xf32>
    %cst_14 = arith.constant dense<0.000000e+00> : vector<64xf32>
    %34 = vector.multi_reduction <add>, %33, %cst_14 [1] : vector<64x128xf32> to vector<64xf32>
    %35 = vector.shape_cast %34 : vector<64xf32> to vector<64x1xf32>
    %cst_15 = arith.constant 1.000000e-07 : f32
    %36 = vector.broadcast %cst_15 : f32 to vector<64x1xf32>
    %37 = arith.addf %35, %36 : vector<64x1xf32>
    %cst_16 = arith.constant 9.99999997E-7 : f32
    %38 = vector.broadcast %cst_16 : f32 to vector<64x1xf32>
    %39 = arith.maximumf %37, %38 : vector<64x1xf32>
    %40 = math.sqrt %39 : vector<64x1xf32>
    %41 = math.rsqrt %39 : vector<64x1xf32>
    %cst_17 = arith.constant 5.000000e+01 : f32
    %42 = vector.broadcast %cst_17 : f32 to vector<64x1xf32>
    %43 = arith.minimumf %40, %42 : vector<64x1xf32>
    %cst_18 = arith.constant 1.000000e+00 : f32
    %44 = vector.broadcast %cst_18 : f32 to vector<64x1xf32>
    %45 = arith.mulf %43, %44 : vector<64x1xf32>
    %46 = math.exp %45 : vector<64x1xf32>
    %cst_19 = arith.constant 0.000000e+00 : f32
    %47 = vector.broadcast %cst_19 : f32 to vector<64x1xf32>
    %48 = arith.subf %47, %45 : vector<64x1xf32>
    %49 = math.exp %48 : vector<64x1xf32>
    %50 = arith.subf %46, %49 : vector<64x1xf32>
    %cst_20 = arith.constant 5.000000e-01 : f32
    %51 = vector.broadcast %cst_20 : f32 to vector<64x1xf32>
    %52 = arith.mulf %51, %50 : vector<64x1xf32>
    %cst_21 = arith.constant 1.000000e+00 : f32
    %53 = vector.broadcast %cst_21 : f32 to vector<64x1xf32>
    %54 = arith.mulf %53, %52 : vector<64x1xf32>
    %55 = arith.mulf %54, %41 : vector<64x1xf32>
    %56 = math.sqrt %35 : vector<64x1xf32>
    %57 = arith.mulf %55, %56 : vector<64x1xf32>
    %cst_22 = arith.constant 1.000000e+03 : f32
    %58 = vector.broadcast %cst_22 : f32 to vector<64x1xf32>
    %59 = arith.cmpf ogt, %57, %58 : vector<64x1xf32>
    %cst_23 = arith.constant 1.000000e-07 : f32
    %60 = vector.broadcast %cst_23 : f32 to vector<64x1xf32>
    %61 = arith.addf %57, %60 : vector<64x1xf32>
    %cst_24 = arith.constant 1.000000e+03 : f32
    %62 = vector.broadcast %cst_24 : f32 to vector<64x1xf32>
    %63 = arith.divf %62, %61 : vector<64x1xf32>
    %cst_25 = arith.constant 1.000000e+00 : f32
    %64 = vector.broadcast %cst_25 : f32 to vector<64x1xf32>
    %65 = arith.select %59, %63, %64 : vector<64x1xi1>, vector<64x1xf32>
    %66 = arith.mulf %57, %65 : vector<64x1xf32>
    %67 = arith.mulf %66, %66 : vector<64x1xf32>
    %cst_26 = arith.constant 1.000000e+00 : f32
    %68 = vector.broadcast %cst_26 : f32 to vector<64x1xf32>
    %69 = arith.addf %68, %67 : vector<64x1xf32>
    %70 = math.sqrt %69 : vector<64x1xf32>
    %71 = tpu.iota {dimensions = array<i32: 1>} : vector<1x128xi32>
    %c0_i32 = arith.constant 0 : i32
    %72 = vector.broadcast %c0_i32 : i32 to vector<1x128xi32>
    %73 = arith.cmpi eq, %71, %72 : vector<1x128xi32>
    %74 = arith.mulf %55, %65 : vector<64x1xf32>
    %75 = vector.broadcast %74 : vector<64x1xf32> to vector<64x128xf32>
    %76 = arith.mulf %75, %32 : vector<64x128xf32>
    %77 = vector.shape_cast %73 : vector<1x128xi1> to vector<1x128xi1>
    %78 = vector.broadcast %77 : vector<1x128xi1> to vector<64x128xi1>
    %79 = vector.shape_cast %70 : vector<64x1xf32> to vector<64x1xf32>
    %80 = vector.broadcast %79 : vector<64x1xf32> to vector<64x128xf32>
    %81 = arith.select %78, %80, %76 : vector<64x128xi1>, vector<64x128xf32>
    %82 = math.absf %32 : vector<64x128xf32>
    %cst_27 = arith.constant dense<0.000000e+00> : vector<64xf32>
    %83 = vector.multi_reduction <add>, %82, %cst_27 [1] : vector<64x128xf32> to vector<64xf32>
    %84 = vector.shape_cast %83 : vector<64xf32> to vector<64x1xf32>
    %cst_28 = arith.constant 0.000000e+00 : f32
    %85 = vector.broadcast %cst_28 : f32 to vector<64x1xf32>
    %86 = arith.cmpf ogt, %84, %85 : vector<64x1xf32>
    %cst_29 = arith.constant 0.000000e+00 : f32
    %87 = vector.shape_cast %86 : vector<64x1xi1> to vector<64x1xi1>
    %88 = vector.broadcast %87 : vector<64x1xi1> to vector<64x128xi1>
    %89 = vector.broadcast %cst_29 : f32 to vector<64x128xf32>
    %90 = arith.select %88, %81, %89 : vector<64x128xi1>, vector<64x128xf32>
    %c0_30 = arith.constant 0 : index
    %c0_31 = arith.constant 0 : index
    %91 = vector.load %arg5[%c0_30, %c0_31] : memref<64x128xf32, #tpu.memory_space<vmem>>, vector<64x128xf32>
    tpu.vector_store %arg5[%c0_30, %c0_31], %90 {strides = array<i32>} : memref<64x128xf32, #tpu.memory_space<vmem>>, vector<64x128xf32>,
    return
  }
  func.func @transform_0(%arg0: i32) -> (i32, i32) {
    %c0_i32 = arith.constant 0 : i32
    %c0_i32_0 = arith.constant 0 : i32
    return %arg0, %c0_i32 : i32, i32
  }
  func.func @transform_1(%arg0: i32) -> (i32, i32) {
    %c0_i32 = arith.constant 0 : i32
    %c0_i32_0 = arith.constant 0 : i32
    %c0_i32_1 = arith.constant 0 : i32
    return %c0_i32, %c0_i32_0 : i32, i32
  }
  func.func @transform_2(%arg0: i32) -> (i32, i32) {
    %c0_i32 = arith.constant 0 : i32
    %c0_i32_0 = arith.constant 0 : i32
    %c0_i32_1 = arith.constant 0 : i32
    return %c0_i32, %c0_i32_0 : i32, i32
  }
  func.func @transform_3(%arg0: i32) -> (i32, i32) {
    %c0_i32 = arith.constant 0 : i32
    %c0_i32_0 = arith.constant 0 : i32
    %c0_i32_1 = arith.constant 0 : i32
    return %c0_i32, %c0_i32_0 : i32, i32
  }
  func.func @transform_4(%arg0: i32) -> (i32, i32) {
    %c0_i32 = arith.constant 0 : i32
    %c0_i32_0 = arith.constant 0 : i32
    return %arg0, %c0_i32 : i32, i32
  }
}

</mosaic_0001>

<llo_original>
// kernel: tpu_custom_call.1
$region0: #{tpu_custom_call.1}
  #allocation0 [shape = 'u32[]', space=smem, size = 0x4, offset = 0x4, fixed_abs, tag = 'smem constant byte address 0x4 - core index']
  #allocation1 [shape = 'u32[144,128]{1,0:T(1,128)}', space=vmem, size = 0x12000, scoped, tag = 'internal scratch']
  %s0 = inlined_call_operand.vmem [shape: f32[64,16], index: 0, kind: input, shape index: {}]
  %s1 = inlined_call_operand.vmem [shape: f32[16,128], index: 1, kind: input, shape index: {}]
  %s2 = inlined_call_operand.vmem [shape: f32[1,128], index: 2, kind: input, shape index: {}]
  %s3 = inlined_call_operand.vmem [shape: f32[1,16], index: 3, kind: input, shape index: {}]
  %s4 = inlined_call_operand.hbm [shape: f32[64,128], index: 4, kind: output, shape index: {}]
  %s5 = sld [smem:[#allocation0]]
  $region26: #{tpu_custom_call.1} parent=0
    _
  %s7 = ssub.s32 1, %s5
  %s8 = scalar_select 0, %s7, %s5
  $region1: #{tpu_custom_call.1} parent=0
    #allocation2 [shape = 'u8[32768]{0}', space=vmem, size = 0x8000, scoped, tag = 'output window, operand 0, single buffered']
    #allocation3 [shape = 's32[1]{0}', space=sflag, size = 0x4, scoped, tag = 'scoped memory for tpu_custom_call.1']
    %9 = vsyncpa [#allocation3], 0
    // Predicated region
    $region2: #{tpu_custom_call.1} parent=1 // pred_check
      _
    $region3: #{tpu_custom_call.1} parent=1 // pred_check_branch
      %11 = sbr.rel (0) target = $region5
    $region4: #{tpu_custom_call.1} parent=1 // pred_region
      _
    $region5: #{tpu_custom_call.1} parent=1 // pred_fallthru
      _
    // Predicated region
    $region6: #{tpu_custom_call.1} parent=1 // pred_check
      _
    $region7: #{tpu_custom_call.1} parent=1 // pred_check_branch
      %13 = sbr.rel (0) target = $region9
    $region8: #{tpu_custom_call.1} parent=1 // pred_region
      _
    $region9: #{tpu_custom_call.1} parent=1 // pred_fallthru
      _
    // Predicated region
    $region10: #{tpu_custom_call.1} parent=1 // pred_check
      _
    $region11: #{tpu_custom_call.1} parent=1 // pred_check_branch
      %15 = sbr.rel (0) target = $region13
    $region12: #{tpu_custom_call.1} parent=1 // pred_region
      _
    $region13: #{tpu_custom_call.1} parent=1 // pred_fallthru
      _
    // Predicated region
    $region14: #{tpu_custom_call.1} parent=1 // pred_check
      _
    $region15: #{tpu_custom_call.1} parent=1 // pred_check_branch
      %17 = sbr.rel (0) target = $region17
    $region16: #{tpu_custom_call.1} parent=1 // pred_region
      _
    $region17: #{tpu_custom_call.1} parent=1 // pred_fallthru
      _
    %v18 = vld [vmem:[%s0] sm:$0xff]
    %v19 = vld [vmem:[%s0 + $0x8] sm:$0xff]
    %v20 = vld [vmem:[%s0 + $0x10] sm:$0xff]
    %v21 = vld [vmem:[%s0 + $0x18] sm:$0xff]
    %v22 = vld [vmem:[%s0 + $0x20] sm:$0xff]
    %v23 = vld [vmem:[%s0 + $0x28] sm:$0xff]
    %v24 = vld [vmem:[%s0 + $0x30] sm:$0xff]
    %v25 = vld [vmem:[%s0 + $0x38] sm:$0xff]
    %v26 = vld [vmem:[%s3] sm:$0x1]
    %v27 = vmul.f32 %v18, %v18
    %v28 = vmul.f32 %v19, %v19
    %v29 = vmul.f32 %v20, %v20
    %v30 = vmul.f32 %v21, %v21
    %v31 = vmul.f32 %v22, %v22
    %v32 = vmul.f32 %v23, %v23
    %v33 = vmul.f32 %v24, %v24
    %v34 = vmul.f32 %v25, %v25
    %v36 = vlaneseq
    %v37 = vshrl.u32 %v36, 7
    %v38 = vsub.s32 0, %v37
    %v39 = vrot.slane %v26, %v38
    %v41 = vmul.f32 %v27, %v39
    %v42 = vmul.f32 %v28, %v39
    %v43 = vmul.f32 %v29, %v39
    %v44 = vmul.f32 %v30, %v39
    %v45 = vmul.f32 %v31, %v39
    %v46 = vmul.f32 %v32, %v39
    %v47 = vmul.f32 %v33, %v39
    %v48 = vmul.f32 %v34, %v39
    %vm49 = vcmask 130048
    %v50 = vsel %vm49, %v41, 0.0
    %51 = vadd.xlane.f32.xlu0 %v50
    %v52 = vpop.xlane.xlu0 %51
    %v53 = vsel %vm49, %v42, 0.0
    %54 = vadd.xlane.f32.xlu0 %v53
    %v55 = vpop.xlane.xlu0 %54
    %v56 = vsel %vm49, %v43, 0.0
    %57 = vadd.xlane.f32.xlu0 %v56
    %v58 = vpop.xlane.xlu0 %57
    %v59 = vsel %vm49, %v44, 0.0
    %60 = vadd.xlane.f32.xlu0 %v59
    %v61 = vpop.xlane.xlu0 %60
    %v62 = vsel %vm49, %v45, 0.0
    %63 = vadd.xlane.f32.xlu0 %v62
    %v64 = vpop.xlane.xlu0 %63
    %v65 = vsel %vm49, %v46, 0.0
    %66 = vadd.xlane.f32.xlu0 %v65
    %v67 = vpop.xlane.xlu0 %66
    %v68 = vsel %vm49, %v47, 0.0
    %69 = vadd.xlane.f32.xlu0 %v68
    %v70 = vpop.xlane.xlu0 %69
    %v71 = vsel %vm49, %v48, 0.0
    %72 = vadd.xlane.f32.xlu0 %v71
    %v73 = vpop.xlane.xlu0 %72
    %v74 = vadd.f32 %v18, 1e-07
    %v75 = vadd.f32 %v19, 1e-07
    %v76 = vadd.f32 %v20, 1e-07
    %v77 = vadd.f32 %v21, 1e-07
    %v78 = vadd.f32 %v22, 1e-07
    %v79 = vadd.f32 %v23, 1e-07
    %v80 = vadd.f32 %v24, 1e-07
    %v81 = vadd.f32 %v25, 1e-07
    %v82 = vmax.f32 %v74, 1.0000001
    %v83 = vmax.f32 %v75, 1.0000001
    %v84 = vmax.f32 %v76, 1.0000001
    %v85 = vmax.f32 %v77, 1.0000001
    %v86 = vmax.f32 %v78, 1.0000001
    %v87 = vmax.f32 %v79, 1.0000001
    %v88 = vmax.f32 %v80, 1.0000001
    %v89 = vmax.f32 %v81, 1.0000001
    %v90 = vmul.f32 %v82, %v82
    %v91 = vmul.f32 %v83, %v83
    %v92 = vmul.f32 %v84, %v84
    %v93 = vmul.f32 %v85, %v85
    %v94 = vmul.f32 %v86, %v86
    %v95 = vmul.f32 %v87, %v87
    %v96 = vmul.f32 %v88, %v88
    %v97 = vmul.f32 %v89, %v89
    %v98 = vsub.f32 %v90, 1.0
    %v99 = vsub.f32 %v91, 1.0
    %v100 = vsub.f32 %v92, 1.0
    %v101 = vsub.f32 %v93, 1.0
    %v102 = vsub.f32 %v94, 1.0
    %v103 = vsub.f32 %v95, 1.0
    %v104 = vsub.f32 %v96, 1.0
    %v105 = vsub.f32 %v97, 1.0
    %v106 = vrsqrt.pop %v98
    %v107 = vmul.f32 %v98, %v106
    %vm108 = vcmp.eq.f32.partialorder %v98, inf
    %v109 = vsel %vm108, %v98, %v107
    %vm110 = vcmp.eq.f32.partialorder %v98, 0.0
    %v111 = vand.u32 %v98, 2147483648
    %v112 = vsel %vm110, %v111, %v109
    %v113 = vrsqrt.pop %v99
    %v114 = vmul.f32 %v99, %v113
    %vm115 = vcmp.eq.f32.partialorder %v99, inf
    %v116 = vsel %vm115, %v99, %v114
    %vm117 = vcmp.eq.f32.partialorder %v99, 0.0
    %v118 = vand.u32 %v99, 2147483648
    %v119 = vsel %vm117, %v118, %v116
    %v120 = vrsqrt.pop %v100
    %v121 = vmul.f32 %v100, %v120
    %vm122 = vcmp.eq.f32.partialorder %v100, inf
    %v123 = vsel %vm122, %v100, %v121
    %vm124 = vcmp.eq.f32.partialorder %v100, 0.0
    %v125 = vand.u32 %v100, 2147483648
    %v126 = vsel %vm124, %v125, %v123
    %v127 = vrsqrt.pop %v101
    %v128 = vmul.f32 %v101, %v127
    %vm129 = vcmp.eq.f32.partialorder %v101, inf
    %v130 = vsel %vm129, %v101, %v128
    %vm131 = vcmp.eq.f32.partialorder %v101, 0.0
    %v132 = vand.u32 %v101, 2147483648
    %v133 = vsel %vm131, %v132, %v130
    %v134 = vrsqrt.pop %v102
    %v135 = vmul.f32 %v102, %v134
    %vm136 = vcmp.eq.f32.partialorder %v102, inf
    %v137 = vsel %vm136, %v102, %v135
    %vm138 = vcmp.eq.f32.partialorder %v102, 0.0
    %v139 = vand.u32 %v102, 2147483648
    %v140 = vsel %vm138, %v139, %v137
    %v141 = vrsqrt.pop %v103
    %v142 = vmul.f32 %v103, %v141
    %vm143 = vcmp.eq.f32.partialorder %v103, inf
    %v144 = vsel %vm143, %v103, %v142
    %vm145 = vcmp.eq.f32.partialorder %v103, 0.0
    %v146 = vand.u32 %v103, 2147483648
    %v147 = vsel %vm145, %v146, %v144
    %v148 = vrsqrt.pop %v104
    %v149 = vmul.f32 %v104, %v148
    %vm150 = vcmp.eq.f32.partialorder %v104, inf
    %v151 = vsel %vm150, %v104, %v149
    %vm152 = vcmp.eq.f32.partialorder %v104, 0.0
    %v153 = vand.u32 %v104, 2147483648
    %v154 = vsel %vm152, %v153, %v151
    %v155 = vrsqrt.pop %v105
    %v156 = vmul.f32 %v105, %v155
    %vm157 = vcmp.eq.f32.partialorder %v105, inf
    %v158 = vsel %vm157, %v105, %v156
    %vm159 = vcmp.eq.f32.partialorder %v105, 0.0
    %v160 = vand.u32 %v105, 2147483648
    %v161 = vsel %vm159, %v160, %v158
    %v162 = vadd.f32 %v82, %v112
    %v163 = vadd.f32 %v83, %v119
    %v164 = vadd.f32 %v84, %v126
    %v165 = vadd.f32 %v85, %v133
    %v166 = vadd.f32 %v86, %v140
    %v167 = vadd.f32 %v87, %v147
    %v168 = vadd.f32 %v88, %v154
    %v169 = vadd.f32 %v89, %v161
    %v170 = vlog2.pop %v162
    %v171 = vmul.f32 %v170, 0.6931472
    %v172 = vlog2.pop %v163
    %v173 = vmul.f32 %v172, 0.6931472
    %v174 = vlog2.pop %v164
    %v175 = vmul.f32 %v174, 0.6931472
    %v176 = vlog2.pop %v165
    %v177 = vmul.f32 %v176, 0.6931472
    %v178 = vlog2.pop %v166
    %v179 = vmul.f32 %v178, 0.6931472
    %v180 = vlog2.pop %v167
    %v181 = vmul.f32 %v180, 0.6931472
    %v182 = vlog2.pop %v168
    %v183 = vmul.f32 %v182, 0.6931472
    %v184 = vlog2.pop %v169
    %v185 = vmul.f32 %v184, 0.6931472
    %v186 = vadd.f32 %v52, 1e-07
    %v187 = vadd.f32 %v55, 1e-07
    %v188 = vadd.f32 %v58, 1e-07
    %v189 = vadd.f32 %v61, 1e-07
    %v190 = vadd.f32 %v64, 1e-07
    %v191 = vadd.f32 %v67, 1e-07
    %v192 = vadd.f32 %v70, 1e-07
    %v193 = vadd.f32 %v73, 1e-07
    %v194 = vrsqrt.pop %v186
    %v195 = vrsqrt.pop %v187
    %v196 = vrsqrt.pop %v188
    %v197 = vrsqrt.pop %v189
    %v198 = vrsqrt.pop %v190
    %v199 = vrsqrt.pop %v191
    %v200 = vrsqrt.pop %v192
    %v201 = vrsqrt.pop %v193
    %v202 = vmul.f32 %v171, %v194
    %v203 = vmul.f32 %v173, %v195
    %v204 = vmul.f32 %v175, %v196
    %v205 = vmul.f32 %v177, %v197
    %v206 = vmul.f32 %v179, %v198
    %v207 = vmul.f32 %v181, %v199
    %v208 = vmul.f32 %v183, %v200
    %v209 = vmul.f32 %v185, %v201
    %211 = vset.pattern.permute.xlu0 0
    %212 = vperm.xlu0 %211, %v202
    %v213 = vpop.permute.xlu0 %212
    %216 = vset.pattern.permute.xlu0 0
    %217 = vperm.xlu0 %216, %v203
    %v218 = vpop.permute.xlu0 %217
    %221 = vset.pattern.permute.xlu0 0
    %222 = vperm.xlu0 %221, %v204
    %v223 = vpop.permute.xlu0 %222
    %226 = vset.pattern.permute.xlu0 0
    %227 = vperm.xlu0 %226, %v205
    %v228 = vpop.permute.xlu0 %227
    %231 = vset.pattern.permute.xlu0 0
    %232 = vperm.xlu0 %231, %v206
    %v233 = vpop.permute.xlu0 %232
    %236 = vset.pattern.permute.xlu0 0
    %237 = vperm.xlu0 %236, %v207
    %v238 = vpop.permute.xlu0 %237
    %241 = vset.pattern.permute.xlu0 0
    %242 = vperm.xlu0 %241, %v208
    %v243 = vpop.permute.xlu0 %242
    %246 = vset.pattern.permute.xlu0 0
    %247 = vperm.xlu0 %246, %v209
    %v248 = vpop.permute.xlu0 %247
    %v250 = vmul.f32 %v213, %v18
    %v251 = vmul.f32 %v218, %v19
    %v252 = vmul.f32 %v223, %v20
    %v253 = vmul.f32 %v228, %v21
    %v254 = vmul.f32 %v233, %v22
    %v255 = vmul.f32 %v238, %v23
    %v256 = vmul.f32 %v243, %v24
    %v257 = vmul.f32 %v248, %v25
    %v258 = vld [vmem:[%s1] sm:$0xff]
    %v259 = vld [vmem:[%s1 + $0x8] sm:$0xff]
    %v260 = vld [vmem:[%s2] sm:$0x1]
    %v262 = vlaneseq
    %v263 = vshrl.u32 %v262, 7
    %v264 = vsub.s32 0, %v263
    %v265 = vrot.slane %v260, %v264
    %v268 = vsel %vm49, %v250, 0
    %v271 = vsel %vm49, %v251, 0
    %v274 = vsel %vm49, %v252, 0
    %v277 = vsel %vm49, %v253, 0
    %v280 = vsel %vm49, %v254, 0
    %v283 = vsel %vm49, %v255, 0
    %v286 = vsel %vm49, %v256, 0
    %v289 = vsel %vm49, %v257, 0
    %291 = vmatprep.subr.mxu0 0.0
    %v292 = vand.u32 %v258, 4294901760
    %293 = vmatpush1.msra.mxu0 %v292
    %294 = vmatprep.subr.mxu0 0.0
    %v295 = vand.u32 %v259, 4294901760
    %296 = vmatpush1.msra.mxu0 %v295
    %297 = vmatprep.subr.mxu0 0.0
    %298 = vmatpush1.msra.mxu0 0.0
    %299 = vmatprep.subr.mxu0 0.0
    %300 = vmatpush1.msra.mxu0 0.0
    %301 = vmatprep.subr.mxu0 0.0
    %302 = vmatpush1.msra.mxu0 0.0
    %303 = vmatprep.subr.mxu0 0.0
    %304 = vmatpush1.msra.mxu0 0.0
    %305 = vmatprep.subr.mxu0 0.0
    %306 = vmatpush1.msra.mxu0 0.0
    %307 = vmatprep.subr.mxu0 0.0
    %308 = vmatpush1.msra.mxu0 0.0
    %309 = vmatprep.subr.mxu0 0.0
    %310 = vmatpush1.msra.mxu0 0.0
    %311 = vmatprep.subr.mxu0 0.0
    %312 = vmatpush1.msra.mxu0 0.0
    %313 = vmatprep.subr.mxu0 0.0
    %314 = vmatpush1.msra.mxu0 0.0
    %315 = vmatprep.subr.mxu0 0.0
    %316 = vmatpush1.msra.mxu0 0.0
    %317 = vmatprep.subr.mxu0 0.0
    %318 = vmatpush1.msra.mxu0 0.0
    %319 = vmatprep.subr.mxu0 0.0
    %320 = vmatpush1.msra.mxu0 0.0
    %321 = vmatprep.subr.mxu0 0.0
    %322 = vmatpush1.msra.mxu0 0.0
    %323 = vmatprep.subr.mxu0 0.0
    %324 = vmatpush1.msra.mxu0 0.0
    %325 = vmatprep.subr.mxu0 0.0
    %326 = vmatpush1.msra.mxu0 0.0
    %327 = vmatprep.subr.mxu0 0.0
    %328 = vmatpush1.msra.mxu0 0.0
    %329 = vmatprep.subr.mxu0 0.0
    %330 = vmatpush1.msra.mxu0 0.0
    %331 = vmatprep.subr.mxu0 0.0
    %332 = vmatpush1.msra.mxu0 0.0
    %333 = vmatprep.subr.mxu0 0.0
    %334 = vmatpush1.msra.mxu0 0.0
    %335 = vmatprep.subr.mxu0 0.0
    %336 = vmatpush1.msra.mxu0 0.0
    %337 = vmatprep.subr.mxu0 0.0
    %338 = vmatpush1.msra.mxu0 0.0
    %339 = vmatprep.subr.mxu0 0.0
    %340 = vmatpush1.msra.mxu0 0.0
    %341 = vmatprep.subr.mxu0 0.0
    %342 = vmatpush1.msra.mxu0 0.0
    %343 = vmatprep.subr.mxu0 0.0
    %344 = vmatpush1.msra.mxu0 0.0
    %345 = vmatprep.subr.mxu0 0.0
    %346 = vmatpush1.msra.mxu0 0.0
    %347 = vmatprep.subr.mxu0 0.0
    %348 = vmatpush1.msra.mxu0 0.0
    %349 = vmatprep.subr.mxu0 0.0
    %350 = vmatpush1.msra.mxu0 0.0
    %351 = vmatprep.subr.mxu0 0.0
    %352 = vmatpush1.msra.mxu0 0.0
    %353 = vmatprep.subr.mxu0 0.0
    %354 = vmatpush1.msra.mxu0 0.0
    %355 = vmatprep.subr.mxu0 0.0
    %356 = vmatpush1.msra.mxu0 0.0
    %357 = vmatprep.mubr.f32.mxu0 0.0
    %v358 = vand.u32 %v268, 4294901760
    %v359 = vsub.f32 %v268, %v358
    %v360 = vand.u32 %v359, 4294901760
    %v361 = vsub.f32 %v359, %v360
    %v362 = vand.u32 %v361, 4294901760
    %363 = vmatmul.mubr.f32.gmra.mrb[0].mxu0 %v362
    %v364 = vpop.f32.mrb[0].mxu0
    %v365 = vadd.f32 %v265, %v364
    %v366 = vpop.f32.mrb[0].mxu0
    %367 = vmatprep.mubr.f32.mxu0 0.0
    %v368 = vand.u32 %v271, 4294901760
    %v369 = vsub.f32 %v271, %v368
    %v370 = vand.u32 %v369, 4294901760
    %v371 = vsub.f32 %v369, %v370
    %v372 = vand.u32 %v371, 4294901760
    %373 = vmatmul.mubr.f32.gmra.mrb[0].mxu0 %v372
    %v374 = vpop.f32.mrb[0].mxu0
    %v375 = vadd.f32 %v265, %v374
    %v376 = vpop.f32.mrb[0].mxu0
    %377 = vmatprep.mubr.f32.mxu0 0.0
    %v378 = vand.u32 %v274, 4294901760
    %v379 = vsub.f32 %v274, %v378
    %v380 = vand.u32 %v379, 4294901760
    %v381 = vsub.f32 %v379, %v380
    %v382 = vand.u32 %v381, 4294901760
    %383 = vmatmul.mubr.f32.gmra.mrb[0].mxu0 %v382
    %v384 = vpop.f32.mrb[0].mxu0
    %v385 = vadd.f32 %v265, %v384
    %v386 = vpop.f32.mrb[0].mxu0
    %387 = vmatprep.mubr.f32.mxu0 0.0
    %v388 = vand.u32 %v277, 4294901760
    %v389 = vsub.f32 %v277, %v388
    %v390 = vand.u32 %v389, 4294901760
    %v391 = vsub.f32 %v389, %v390
    %v392 = vand.u32 %v391, 4294901760
    %393 = vmatmul.mubr.f32.gmra.mrb[0].mxu0 %v392
    %v394 = vpop.f32.mrb[0].mxu0
    %v395 = vadd.f32 %v265, %v394
    %v396 = vpop.f32.mrb[0].mxu0
    %397 = vmatprep.mubr.f32.mxu0 0.0
    %v398 = vand.u32 %v280, 4294901760
    %v399 = vsub.f32 %v280, %v398
    %v400 = vand.u32 %v399, 4294901760
    %v401 = vsub.f32 %v399, %v400
    %v402 = vand.u32 %v401, 4294901760
    %403 = vmatmul.mubr.f32.gmra.mrb[0].mxu0 %v402
    %v404 = vpop.f32.mrb[0].mxu0
    %v405 = vadd.f32 %v265, %v404
    %v406 = vpop.f32.mrb[0].mxu0
    %407 = vmatprep.mubr.f32.mxu0 0.0
    %v408 = vand.u32 %v283, 4294901760
    %v409 = vsub.f32 %v283, %v408
    %v410 = vand.u32 %v409, 4294901760
    %v411 = vsub.f32 %v409, %v410
    %v412 = vand.u32 %v411, 4294901760
    %413 = vmatmul.mubr.f32.gmra.mrb[0].mxu0 %v412
    %v414 = vpop.f32.mrb[0].mxu0
    %v415 = vadd.f32 %v265, %v414
    %v416 = vpop.f32.mrb[0].mxu0
    %417 = vmatprep.mubr.f32.mxu0 0.0
    %v418 = vand.u32 %v286, 4294901760
    %v419 = vsub.f32 %v286, %v418
    %v420 = vand.u32 %v419, 4294901760
    %v421 = vsub.f32 %v419, %v420
    %v422 = vand.u32 %v421, 4294901760
    %423 = vmatmul.mubr.f32.gmra.mrb[0].mxu0 %v422
    %v424 = vpop.f32.mrb[0].mxu0
    %v425 = vadd.f32 %v265, %v424
    %v426 = vpop.f32.mrb[0].mxu0
    %427 = vmatprep.mubr.f32.mxu0 0.0
    %v428 = vand.u32 %v289, 4294901760
    %v429 = vsub.f32 %v289, %v428
    %v430 = vand.u32 %v429, 4294901760
    %v431 = vsub.f32 %v429, %v430
    %v432 = vand.u32 %v431, 4294901760
    %433 = vmatmul.mubr.f32.gmra.mrb[0].mxu0 %v432
    %v434 = vpop.f32.mrb[0].mxu0
    %v435 = vadd.f32 %v265, %v434
    %v436 = vpop.f32.mrb[0].mxu0
    %437 = vdwg.mxu0
    %438 = vmatprep.subr.mxu0 0.0
    %v439 = vand.u32 %v258, 4294901760
    %v440 = vsub.f32 %v258, %v439
    %v441 = vand.u32 %v440, 4294901760
    %v442 = vsub.f32 %v440, %v441
    %v443 = vand.u32 %v442, 4294901760
    %444 = vmatpush1.msra.mxu0 %v443
    %445 = vmatprep.subr.mxu0 0.0
    %v446 = vand.u32 %v259, 4294901760
    %v447 = vsub.f32 %v259, %v446
    %v448 = vand.u32 %v447, 4294901760
    %v449 = vsub.f32 %v447, %v448
    %v450 = vand.u32 %v449, 4294901760
    %451 = vmatpush1.msra.mxu0 %v450
    %452 = vmatprep.subr.mxu0 0.0
    %453 = vmatpush1.msra.mxu0 0.0
    %454 = vmatprep.subr.mxu0 0.0
    %455 = vmatpush1.msra.mxu0 0.0
    %456 = vmatprep.subr.mxu0 0.0
    %457 = vmatpush1.msra.mxu0 0.0
    %458 = vmatprep.subr.mxu0 0.0
    %459 = vmatpush1.msra.mxu0 0.0
    %460 = vmatprep.subr.mxu0 0.0
    %461 = vmatpush1.msra.mxu0 0.0
    %462 = vmatprep.subr.mxu0 0.0
    %463 = vmatpush1.msra.mxu0 0.0
    %464 = vmatprep.subr.mxu0 0.0
    %465 = vmatpush1.msra.mxu0 0.0
    %466 = vmatprep.subr.mxu0 0.0
    %467 = vmatpush1.msra.mxu0 0.0
    %468 = vmatprep.subr.mxu0 0.0
    %469 = vmatpush1.msra.mxu0 0.0
    %470 = vmatprep.subr.mxu0 0.0
    %471 = vmatpush1.msra.mxu0 0.0
    %472 = vmatprep.subr.mxu0 0.0
    %473 = vmatpush1.msra.mxu0 0.0
    %474 = vmatprep.subr.mxu0 0.0
    %475 = vmatpush1.msra.mxu0 0.0
    %476 = vmatprep.subr.mxu0 0.0
    %477 = vmatpush1.msra.mxu0 0.0
    %478 = vmatprep.subr.mxu0 0.0
    %479 = vmatpush1.msra.mxu0 0.0
    %480 = vmatprep.subr.mxu0 0.0
    %481 = vmatpush1.msra.mxu0 0.0
    %482 = vmatprep.subr.mxu0 0.0
    %483 = vmatpush1.msra.mxu0 0.0
    %484 = vmatprep.subr.mxu0 0.0
    %485 = vmatpush1.msra.mxu0 0.0
    %486 = vmatprep.subr.mxu0 0.0
    %487 = vmatpush1.msra.mxu0 0.0
    %488 = vmatprep.subr.mxu0 0.0
    %489 = vmatpush1.msra.mxu0 0.0
    %490 = vmatprep.subr.mxu0 0.0
    %491 = vmatpush1.msra.mxu0 0.0
    %492 = vmatprep.subr.mxu0 0.0
    %493 = vmatpush1.msra.mxu0 0.0
    %494 = vmatprep.subr.mxu0 0.0
    %495 = vmatpush1.msra.mxu0 0.0
    %496 = vmatprep.subr.mxu0 0.0
    %497 = vmatpush1.msra.mxu0 0.0
    %498 = vmatprep.subr.mxu0 0.0
    %499 = vmatpush1.msra.mxu0 0.0
    %500 = vmatprep.subr.mxu0 0.0
    %501 = vmatpush1.msra.mxu0 0.0
    %502 = vmatprep.subr.mxu0 0.0
    %503 = vmatpush1.msra.mxu0 0.0
    %504 = vmatprep.subr.mxu0 0.0
    %505 = vmatpush1.msra.mxu0 0.0
    %506 = vmatprep.subr.mxu0 0.0
    %507 = vmatpush1.msra.mxu0 0.0
    %508 = vmatprep.subr.mxu0 0.0
    %509 = vmatpush1.msra.mxu0 0.0
    %510 = vmatprep.subr.mxu0 0.0
    %511 = vmatpush1.msra.mxu0 0.0
    %512 = vmatprep.mubr.f32.mxu0 0.0
    %v513 = vand.u32 %v268, 4294901760
    %514 = vmatmul.mubr.f32.gmra.mrb[0].mxu0 %v513
    %v515 = vpop.f32.mrb[0].mxu0
    %v516 = vadd.f32 %v365, %v515
    %v517 = vpop.f32.mrb[0].mxu0
    %518 = vmatprep.mubr.f32.mxu0 0.0
    %v519 = vand.u32 %v271, 4294901760
    %520 = vmatmul.mubr.f32.gmra.mrb[0].mxu0 %v519
    %v521 = vpop.f32.mrb[0].mxu0
    %v522 = vadd.f32 %v375, %v521
    %v523 = vpop.f32.mrb[0].mxu0
    %524 = vmatprep.mubr.f32.mxu0 0.0
    %v525 = vand.u32 %v274, 4294901760
    %526 = vmatmul.mubr.f32.gmra.mrb[0].mxu0 %v525
    %v527 = vpop.f32.mrb[0].mxu0
    %v528 = vadd.f32 %v385, %v527
    %v529 = vpop.f32.mrb[0].mxu0
    %530 = vmatprep.mubr.f32.mxu0 0.0
    %v531 = vand.u32 %v277, 4294901760
    %532 = vmatmul.mubr.f32.gmra.mrb[0].mxu0 %v531
    %v533 = vpop.f32.mrb[0].mxu0
    %v534 = vadd.f32 %v395, %v533
    %v535 = vpop.f32.mrb[0].mxu0
    %536 = vmatprep.mubr.f32.mxu0 0.0
    %v537 = vand.u32 %v280, 4294901760
    %538 = vmatmul.mubr.f32.gmra.mrb[0].mxu0 %v537
    %v539 = vpop.f32.mrb[0].mxu0
    %v540 = vadd.f32 %v405, %v539
    %v541 = vpop.f32.mrb[0].mxu0
    %542 = vmatprep.mubr.f32.mxu0 0.0
    %v543 = vand.u32 %v283, 4294901760
    %544 = vmatmul.mubr.f32.gmra.mrb[0].mxu0 %v543
    %v545 = vpop.f32.mrb[0].mxu0
    %v546 = vadd.f32 %v415, %v545
    %v547 = vpop.f32.mrb[0].mxu0
    %548 = vmatprep.mubr.f32.mxu0 0.0
    %v549 = vand.u32 %v286, 4294901760
    %550 = vmatmul.mubr.f32.gmra.mrb[0].mxu0 %v549
    %v551 = vpop.f32.mrb[0].mxu0
    %v552 = vadd.f32 %v425, %v551
    %v553 = vpop.f32.mrb[0].mxu0
    %554 = vmatprep.mubr.f32.mxu0 0.0
    %v555 = vand.u32 %v289, 4294901760
    %556 = vmatmul.mubr.f32.gmra.mrb[0].mxu0 %v555
    %v557 = vpop.f32.mrb[0].mxu0
    %v558 = vadd.f32 %v435, %v557
    %v559 = vpop.f32.mrb[0].mxu0
    %560 = vdwg.mxu0
    %561 = vmatprep.subr.mxu0 0.0
    %v562 = vand.u32 %v258, 4294901760
    %v563 = vsub.f32 %v258, %v562
    %564 = vmatpush1.msra.mxu0 %v563
    %565 = vmatprep.subr.mxu0 0.0
    %v566 = vand.u32 %v259, 4294901760
    %v567 = vsub.f32 %v259, %v566
    %568 = vmatpush1.msra.mxu0 %v567
    %569 = vmatprep.subr.mxu0 0.0
    %570 = vmatpush1.msra.mxu0 0.0
    %571 = vmatprep.subr.mxu0 0.0
    %572 = vmatpush1.msra.mxu0 0.0
    %573 = vmatprep.subr.mxu0 0.0
    %574 = vmatpush1.msra.mxu0 0.0
    %575 = vmatprep.subr.mxu0 0.0
    %576 = vmatpush1.msra.mxu0 0.0
    %577 = vmatprep.subr.mxu0 0.0
    %578 = vmatpush1.msra.mxu0 0.0
    %579 = vmatprep.subr.mxu0 0.0
    %580 = vmatpush1.msra.mxu0 0.0
    %581 = vmatprep.subr.mxu0 0.0
    %582 = vmatpush1.msra.mxu0 0.0
    %583 = vmatprep.subr.mxu0 0.0
    %584 = vmatpush1.msra.mxu0 0.0
    %585 = vmatprep.subr.mxu0 0.0
    %586 = vmatpush1.msra.mxu0 0.0
    %587 = vmatprep.subr.mxu0 0.0
    %588 = vmatpush1.msra.mxu0 0.0
    %589 = vmatprep.subr.mxu0 0.0
    %590 = vmatpush1.msra.mxu0 0.0
    %591 = vmatprep.subr.mxu0 0.0
    %592 = vmatpush1.msra.mxu0 0.0
    %593 = vmatprep.subr.mxu0 0.0
    %594 = vmatpush1.msra.mxu0 0.0
    %595 = vmatprep.subr.mxu0 0.0
    %596 = vmatpush1.msra.mxu0 0.0
    %597 = vmatprep.subr.mxu0 0.0
    %598 = vmatpush1.msra.mxu0 0.0
    %599 = vmatprep.subr.mxu0 0.0
    %600 = vmatpush1.msra.mxu0 0.0
    %601 = vmatprep.subr.mxu0 0.0
    %602 = vmatpush1.msra.mxu0 0.0
    %603 = vmatprep.subr.mxu0 0.0
    %604 = vmatpush1.msra.mxu0 0.0
    %605 = vmatprep.subr.mxu0 0.0
    %606 = vmatpush1.msra.mxu0 0.0
    %607 = vmatprep.subr.mxu0 0.0
    %608 = vmatpush1.msra.mxu0 0.0
    %609 = vmatprep.subr.mxu0 0.0
    %610 = vmatpush1.msra.mxu0 0.0
    %611 = vmatprep.subr.mxu0 0.0
    %612 = vmatpush1.msra.mxu0 0.0
    %613 = vmatprep.subr.mxu0 0.0
    %614 = vmatpush1.msra.mxu0 0.0
    %615 = vmatprep.subr.mxu0 0.0
    %616 = vmatpush1.msra.mxu0 0.0
    %617 = vmatprep.subr.mxu0 0.0
    %618 = vmatpush1.msra.mxu0 0.0
    %619 = vmatprep.subr.mxu0 0.0
    %620 = vmatpush1.msra.mxu0 0.0
    %621 = vmatprep.subr.mxu0 0.0
    %622 = vmatpush1.msra.mxu0 0.0
    %623 = vmatprep.subr.mxu0 0.0
    %624 = vmatpush1.msra.mxu0 0.0
    %625 = vmatprep.subr.mxu0 0.0
    %626 = vmatpush1.msra.mxu0 0.0
    %627 = vmatprep.subr.mxu0 0.0
    %628 = vmatpush1.msra.mxu0 0.0
    %629 = vmatprep.mubr.f32.mxu0 0.0
    %v630 = vand.u32 %v268, 4294901760
    %v631 = vsub.f32 %v268, %v630
    %632 = vmatmul.mubr.f32.gmra.mrb[0].mxu0 %v631
    %v633 = vpop.f32.mrb[0].mxu0
    %v634 = vadd.f32 %v516, %v633
    %v635 = vpop.f32.mrb[0].mxu0
    %636 = vmatprep.mubr.f32.mxu0 0.0
    %v637 = vand.u32 %v271, 4294901760
    %v638 = vsub.f32 %v271, %v637
    %639 = vmatmul.mubr.f32.gmra.mrb[0].mxu0 %v638
    %v640 = vpop.f32.mrb[0].mxu0
    %v641 = vadd.f32 %v522, %v640
    %v642 = vpop.f32.mrb[0].mxu0
    %643 = vmatprep.mubr.f32.mxu0 0.0
    %v644 = vand.u32 %v274, 4294901760
    %v645 = vsub.f32 %v274, %v644
    %646 = vmatmul.mubr.f32.gmra.mrb[0].mxu0 %v645
    %v647 = vpop.f32.mrb[0].mxu0
    %v648 = vadd.f32 %v528, %v647
    %v649 = vpop.f32.mrb[0].mxu0
    %650 = vmatprep.mubr.f32.mxu0 0.0
    %v651 = vand.u32 %v277, 4294901760
    %v652 = vsub.f32 %v277, %v651
    %653 = vmatmul.mubr.f32.gmra.mrb[0].mxu0 %v652
    %v654 = vpop.f32.mrb[0].mxu0
    %v655 = vadd.f32 %v534, %v654
    %v656 = vpop.f32.mrb[0].mxu0
    %657 = vmatprep.mubr.f32.mxu0 0.0
    %v658 = vand.u32 %v280, 4294901760
    %v659 = vsub.f32 %v280, %v658
    %660 = vmatmul.mubr.f32.gmra.mrb[0].mxu0 %v659
    %v661 = vpop.f32.mrb[0].mxu0
    %v662 = vadd.f32 %v540, %v661
    %v663 = vpop.f32.mrb[0].mxu0
    %664 = vmatprep.mubr.f32.mxu0 0.0
    %v665 = vand.u32 %v283, 4294901760
    %v666 = vsub.f32 %v283, %v665
    %667 = vmatmul.mubr.f32.gmra.mrb[0].mxu0 %v666
    %v668 = vpop.f32.mrb[0].mxu0
    %v669 = vadd.f32 %v546, %v668
    %v670 = vpop.f32.mrb[0].mxu0
    %671 = vmatprep.mubr.f32.mxu0 0.0
    %v672 = vand.u32 %v286, 4294901760
    %v673 = vsub.f32 %v286, %v672
    %674 = vmatmul.mubr.f32.gmra.mrb[0].mxu0 %v673
    %v675 = vpop.f32.mrb[0].mxu0
    %v676 = vadd.f32 %v552, %v675
    %v677 = vpop.f32.mrb[0].mxu0
    %678 = vmatprep.mubr.f32.mxu0 0.0
    %v679 = vand.u32 %v289, 4294901760
    %v680 = vsub.f32 %v289, %v679
    %681 = vmatmul.mubr.f32.gmra.mrb[0].mxu0 %v680
    %v682 = vpop.f32.mrb[0].mxu0
    %v683 = vadd.f32 %v558, %v682
    %v684 = vpop.f32.mrb[0].mxu0
    %685 = vdwg.mxu0
    %686 = vmatprep.subr.mxu0 0.0
    %v687 = vand.u32 %v258, 4294901760
    %688 = vmatpush1.msra.mxu0 %v687
    %689 = vmatprep.subr.mxu0 0.0
    %v690 = vand.u32 %v259, 4294901760
    %691 = vmatpush1.msra.mxu0 %v690
    %692 = vmatprep.subr.mxu0 0.0
    %693 = vmatpush1.msra.mxu0 0.0
    %694 = vmatprep.subr.mxu0 0.0
    %695 = vmatpush1.msra.mxu0 0.0
    %696 = vmatprep.subr.mxu0 0.0
    %697 = vmatpush1.msra.mxu0 0.0
    %698 = vmatprep.subr.mxu0 0.0
    %699 = vmatpush1.msra.mxu0 0.0
    %700 = vmatprep.subr.mxu0 0.0
    %701 = vmatpush1.msra.mxu0 0.0
    %702 = vmatprep.subr.mxu0 0.0
    %703 = vmatpush1.msra.mxu0 0.0
    %704 = vmatprep.subr.mxu0 0.0
    %705 = vmatpush1.msra.mxu0 0.0
    %706 = vmatprep.subr.mxu0 0.0
    %707 = vmatpush1.msra.mxu0 0.0
    %708 = vmatprep.subr.mxu0 0.0
    %709 = vmatpush1.msra.mxu0 0.0
    %710 = vmatprep.subr.mxu0 0.0
    %711 = vmatpush1.msra.mxu0 0.0
    %712 = vmatprep.subr.mxu0 0.0
    %713 = vmatpush1.msra.mxu0 0.0
    %714 = vmatprep.subr.mxu0 0.0
    %715 = vmatpush1.msra.mxu0 0.0
    %716 = vmatprep.subr.mxu0 0.0
    %717 = vmatpush1.msra.mxu0 0.0
    %718 = vmatprep.subr.mxu0 0.0
    %719 = vmatpush1.msra.mxu0 0.0
    %720 = vmatprep.subr.mxu0 0.0
    %721 = vmatpush1.msra.mxu0 0.0
    %722 = vmatprep.subr.mxu0 0.0
    %723 = vmatpush1.msra.mxu0 0.0
    %724 = vmatprep.subr.mxu0 0.0
    %725 = vmatpush1.msra.mxu0 0.0
    %726 = vmatprep.subr.mxu0 0.0
    %727 = vmatpush1.msra.mxu0 0.0
    %728 = vmatprep.subr.mxu0 0.0
    %729 = vmatpush1.msra.mxu0 0.0
    %730 = vmatprep.subr.mxu0 0.0
    %731 = vmatpush1.msra.mxu0 0.0
    %732 = vmatprep.subr.mxu0 0.0
    %733 = vmatpush1.msra.mxu0 0.0
    %734 = vmatprep.subr.mxu0 0.0
    %735 = vmatpush1.msra.mxu0 0.0
    %736 = vmatprep.subr.mxu0 0.0
    %737 = vmatpush1.msra.mxu0 0.0
    %738 = vmatprep.subr.mxu0 0.0
    %739 = vmatpush1.msra.mxu0 0.0
    %740 = vmatprep.subr.mxu0 0.0
    %741 = vmatpush1.msra.mxu0 0.0
    %742 = vmatprep.subr.mxu0 0.0
    %743 = vmatpush1.msra.mxu0 0.0
    %744 = vmatprep.subr.mxu0 0.0
    %745 = vmatpush1.msra.mxu0 0.0
    %746 = vmatprep.subr.mxu0 0.0
    %747 = vmatpush1.msra.mxu0 0.0
    %748 = vmatprep.subr.mxu0 0.0
    %749 = vmatpush1.msra.mxu0 0.0
    %750 = vmatprep.subr.mxu0 0.0
    %751 = vmatpush1.msra.mxu0 0.0
    %752 = vmatprep.mubr.f32.mxu0 0.0
    %v753 = vand.u32 %v268, 4294901760
    %v754 = vsub.f32 %v268, %v753
    %v755 = vand.u32 %v754, 4294901760
    %756 = vmatmul.mubr.f32.gmra.mrb[0].mxu0 %v755
    %v757 = vpop.f32.mrb[0].mxu0
    %v758 = vadd.f32 %v634, %v757
    %v759 = vpop.f32.mrb[0].mxu0
    %760 = vmatprep.mubr.f32.mxu0 0.0
    %v761 = vand.u32 %v271, 4294901760
    %v762 = vsub.f32 %v271, %v761
    %v763 = vand.u32 %v762, 4294901760
    %764 = vmatmul.mubr.f32.gmra.mrb[0].mxu0 %v763
    %v765 = vpop.f32.mrb[0].mxu0
    %v766 = vadd.f32 %v641, %v765
    %v767 = vpop.f32.mrb[0].mxu0
    %768 = vmatprep.mubr.f32.mxu0 0.0
    %v769 = vand.u32 %v274, 4294901760
    %v770 = vsub.f32 %v274, %v769
    %v771 = vand.u32 %v770, 4294901760
    %772 = vmatmul.mubr.f32.gmra.mrb[0].mxu0 %v771
    %v773 = vpop.f32.mrb[0].mxu0
    %v774 = vadd.f32 %v648, %v773
    %v775 = vpop.f32.mrb[0].mxu0
    %776 = vmatprep.mubr.f32.mxu0 0.0
    %v777 = vand.u32 %v277, 4294901760
    %v778 = vsub.f32 %v277, %v777
    %v779 = vand.u32 %v778, 4294901760
    %780 = vmatmul.mubr.f32.gmra.mrb[0].mxu0 %v779
    %v781 = vpop.f32.mrb[0].mxu0
    %v782 = vadd.f32 %v655, %v781
    %v783 = vpop.f32.mrb[0].mxu0
    %784 = vmatprep.mubr.f32.mxu0 0.0
    %v785 = vand.u32 %v280, 4294901760
    %v786 = vsub.f32 %v280, %v785
    %v787 = vand.u32 %v786, 4294901760
    %788 = vmatmul.mubr.f32.gmra.mrb[0].mxu0 %v787
    %v789 = vpop.f32.mrb[0].mxu0
    %v790 = vadd.f32 %v662, %v789
    %v791 = vpop.f32.mrb[0].mxu0
    %792 = vmatprep.mubr.f32.mxu0 0.0
    %v793 = vand.u32 %v283, 4294901760
    %v794 = vsub.f32 %v283, %v793
    %v795 = vand.u32 %v794, 4294901760
    %796 = vmatmul.mubr.f32.gmra.mrb[0].mxu0 %v795
    %v797 = vpop.f32.mrb[0].mxu0
    %v798 = vadd.f32 %v669, %v797
    %v799 = vpop.f32.mrb[0].mxu0
    %800 = vmatprep.mubr.f32.mxu0 0.0
    %v801 = vand.u32 %v286, 4294901760
    %v802 = vsub.f32 %v286, %v801
    %v803 = vand.u32 %v802, 4294901760
    %804 = vmatmul.mubr.f32.gmra.mrb[0].mxu0 %v803
    %v805 = vpop.f32.mrb[0].mxu0
    %v806 = vadd.f32 %v676, %v805
    %v807 = vpop.f32.mrb[0].mxu0
    %808 = vmatprep.mubr.f32.mxu0 0.0
    %v809 = vand.u32 %v289, 4294901760
    %v810 = vsub.f32 %v289, %v809
    %v811 = vand.u32 %v810, 4294901760
    %812 = vmatmul.mubr.f32.gmra.mrb[0].mxu0 %v811
    %v813 = vpop.f32.mrb[0].mxu0
    %v814 = vadd.f32 %v683, %v813
    %v815 = vpop.f32.mrb[0].mxu0
    %816 = vdwg.mxu0
    %817 = vmatprep.subr.mxu0 0.0
    %v818 = vand.u32 %v258, 4294901760
    %v819 = vsub.f32 %v258, %v818
    %v820 = vand.u32 %v819, 4294901760
    %821 = vmatpush1.msra.mxu0 %v820
    %822 = vmatprep.subr.mxu0 0.0
    %v823 = vand.u32 %v259, 4294901760
    %v824 = vsub.f32 %v259, %v823
    %v825 = vand.u32 %v824, 4294901760
    %826 = vmatpush1.msra.mxu0 %v825
    %827 = vmatprep.subr.mxu0 0.0
    %828 = vmatpush1.msra.mxu0 0.0
    %829 = vmatprep.subr.mxu0 0.0
    %830 = vmatpush1.msra.mxu0 0.0
    %831 = vmatprep.subr.mxu0 0.0
    %832 = vmatpush1.msra.mxu0 0.0
    %833 = vmatprep.subr.mxu0 0.0
    %834 = vmatpush1.msra.mxu0 0.0
    %835 = vmatprep.subr.mxu0 0.0
    %836 = vmatpush1.msra.mxu0 0.0
    %837 = vmatprep.subr.mxu0 0.0
    %838 = vmatpush1.msra.mxu0 0.0
    %839 = vmatprep.subr.mxu0 0.0
    %840 = vmatpush1.msra.mxu0 0.0
    %841 = vmatprep.subr.mxu0 0.0
    %842 = vmatpush1.msra.mxu0 0.0
    %843 = vmatprep.subr.mxu0 0.0
    %844 = vmatpush1.msra.mxu0 0.0
    %845 = vmatprep.subr.mxu0 0.0
    %846 = vmatpush1.msra.mxu0 0.0
    %847 = vmatprep.subr.mxu0 0.0
    %848 = vmatpush1.msra.mxu0 0.0
    %849 = vmatprep.subr.mxu0 0.0
    %850 = vmatpush1.msra.mxu0 0.0
    %851 = vmatprep.subr.mxu0 0.0
    %852 = vmatpush1.msra.mxu0 0.0
    %853 = vmatprep.subr.mxu0 0.0
    %854 = vmatpush1.msra.mxu0 0.0
    %855 = vmatprep.subr.mxu0 0.0
    %856 = vmatpush1.msra.mxu0 0.0
    %857 = vmatprep.subr.mxu0 0.0
    %858 = vmatpush1.msra.mxu0 0.0
    %859 = vmatprep.subr.mxu0 0.0
    %860 = vmatpush1.msra.mxu0 0.0
    %861 = vmatprep.subr.mxu0 0.0
    %862 = vmatpush1.msra.mxu0 0.0
    %863 = vmatprep.subr.mxu0 0.0
    %864 = vmatpush1.msra.mxu0 0.0
    %865 = vmatprep.subr.mxu0 0.0
    %866 = vmatpush1.msra.mxu0 0.0
    %867 = vmatprep.subr.mxu0 0.0
    %868 = vmatpush1.msra.mxu0 0.0
    %869 = vmatprep.subr.mxu0 0.0
    %870 = vmatpush1.msra.mxu0 0.0
    %871 = vmatprep.subr.mxu0 0.0
    %872 = vmatpush1.msra.mxu0 0.0
    %873 = vmatprep.subr.mxu0 0.0
    %874 = vmatpush1.msra.mxu0 0.0
    %875 = vmatprep.subr.mxu0 0.0
    %876 = vmatpush1.msra.mxu0 0.0
    %877 = vmatprep.subr.mxu0 0.0
    %878 = vmatpush1.msra.mxu0 0.0
    %879 = vmatprep.subr.mxu0 0.0
    %880 = vmatpush1.msra.mxu0 0.0
    %881 = vmatprep.subr.mxu0 0.0
    %882 = vmatpush1.msra.mxu0 0.0
    %883 = vmatprep.subr.mxu0 0.0
    %884 = vmatpush1.msra.mxu0 0.0
    %885 = vmatprep.subr.mxu0 0.0
    %886 = vmatpush1.msra.mxu0 0.0
    %887 = vmatprep.mubr.f32.mxu0 0.0
    %v888 = vand.u32 %v268, 4294901760
    %889 = vmatmul.mubr.f32.gmra.mrb[0].mxu0 %v888
    %v890 = vpop.f32.mrb[0].mxu0
    %v891 = vadd.f32 %v758, %v890
    %v892 = vpop.f32.mrb[0].mxu0
    %893 = vmatprep.mubr.f32.mxu0 0.0
    %v894 = vand.u32 %v271, 4294901760
    %895 = vmatmul.mubr.f32.gmra.mrb[0].mxu0 %v894
    %v896 = vpop.f32.mrb[0].mxu0
    %v897 = vadd.f32 %v766, %v896
    %v898 = vpop.f32.mrb[0].mxu0
    %899 = vmatprep.mubr.f32.mxu0 0.0
    %v900 = vand.u32 %v274, 4294901760
    %901 = vmatmul.mubr.f32.gmra.mrb[0].mxu0 %v900
    %v902 = vpop.f32.mrb[0].mxu0
    %v903 = vadd.f32 %v774, %v902
    %v904 = vpop.f32.mrb[0].mxu0
    %905 = vmatprep.mubr.f32.mxu0 0.0
    %v906 = vand.u32 %v277, 4294901760
    %907 = vmatmul.mubr.f32.gmra.mrb[0].mxu0 %v906
    %v908 = vpop.f32.mrb[0].mxu0
    %v909 = vadd.f32 %v782, %v908
    %v910 = vpop.f32.mrb[0].mxu0
    %911 = vmatprep.mubr.f32.mxu0 0.0
    %v912 = vand.u32 %v280, 4294901760
    %913 = vmatmul.mubr.f32.gmra.mrb[0].mxu0 %v912
    %v914 = vpop.f32.mrb[0].mxu0
    %v915 = vadd.f32 %v790, %v914
    %v916 = vpop.f32.mrb[0].mxu0
    %917 = vmatprep.mubr.f32.mxu0 0.0
    %v918 = vand.u32 %v283, 4294901760
    %919 = vmatmul.mubr.f32.gmra.mrb[0].mxu0 %v918
    %v920 = vpop.f32.mrb[0].mxu0
    %v921 = vadd.f32 %v798, %v920
    %v922 = vpop.f32.mrb[0].mxu0
    %923 = vmatprep.mubr.f32.mxu0 0.0
    %v924 = vand.u32 %v286, 4294901760
    %925 = vmatmul.mubr.f32.gmra.mrb[0].mxu0 %v924
    %v926 = vpop.f32.mrb[0].mxu0
    %v927 = vadd.f32 %v806, %v926
    %v928 = vpop.f32.mrb[0].mxu0
    %929 = vmatprep.mubr.f32.mxu0 0.0
    %v930 = vand.u32 %v289, 4294901760
    %931 = vmatmul.mubr.f32.gmra.mrb[0].mxu0 %v930
    %v932 = vpop.f32.mrb[0].mxu0
    %v933 = vadd.f32 %v814, %v932
    %v934 = vpop.f32.mrb[0].mxu0
    %935 = vdwg.mxu0
    %936 = vmatprep.subr.mxu0 0.0
    %v937 = vand.u32 %v258, 4294901760
    %938 = vmatpush1.msra.mxu0 %v937
    %939 = vmatprep.subr.mxu0 0.0
    %v940 = vand.u32 %v259, 4294901760
    %941 = vmatpush1.msra.mxu0 %v940
    %942 = vmatprep.subr.mxu0 0.0
    %943 = vmatpush1.msra.mxu0 0.0
    %944 = vmatprep.subr.mxu0 0.0
    %945 = vmatpush1.msra.mxu0 0.0
    %946 = vmatprep.subr.mxu0 0.0
    %947 = vmatpush1.msra.mxu0 0.0
    %948 = vmatprep.subr.mxu0 0.0
    %949 = vmatpush1.msra.mxu0 0.0
    %950 = vmatprep.subr.mxu0 0.0
    %951 = vmatpush1.msra.mxu0 0.0
    %952 = vmatprep.subr.mxu0 0.0
    %953 = vmatpush1.msra.mxu0 0.0
    %954 = vmatprep.subr.mxu0 0.0
    %955 = vmatpush1.msra.mxu0 0.0
    %956 = vmatprep.subr.mxu0 0.0
    %957 = vmatpush1.msra.mxu0 0.0
    %958 = vmatprep.subr.mxu0 0.0
    %959 = vmatpush1.msra.mxu0 0.0
    %960 = vmatprep.subr.mxu0 0.0
    %961 = vmatpush1.msra.mxu0 0.0
    %962 = vmatprep.subr.mxu0 0.0
    %963 = vmatpush1.msra.mxu0 0.0
    %964 = vmatprep.subr.mxu0 0.0
    %965 = vmatpush1.msra.mxu0 0.0
    %966 = vmatprep.subr.mxu0 0.0
    %967 = vmatpush1.msra.mxu0 0.0
    %968 = vmatprep.subr.mxu0 0.0
    %969 = vmatpush1.msra.mxu0 0.0
    %970 = vmatprep.subr.mxu0 0.0
    %971 = vmatpush1.msra.mxu0 0.0
    %972 = vmatprep.subr.mxu0 0.0
    %973 = vmatpush1.msra.mxu0 0.0
    %974 = vmatprep.subr.mxu0 0.0
    %975 = vmatpush1.msra.mxu0 0.0
    %976 = vmatprep.subr.mxu0 0.0
    %977 = vmatpush1.msra.mxu0 0.0
    %978 = vmatprep.subr.mxu0 0.0
    %979 = vmatpush1.msra.mxu0 0.0
    %980 = vmatprep.subr.mxu0 0.0
    %981 = vmatpush1.msra.mxu0 0.0
    %982 = vmatprep.subr.mxu0 0.0
    %983 = vmatpush1.msra.mxu0 0.0
    %984 = vmatprep.subr.mxu0 0.0
    %985 = vmatpush1.msra.mxu0 0.0
    %986 = vmatprep.subr.mxu0 0.0
    %987 = vmatpush1.msra.mxu0 0.0
    %988 = vmatprep.subr.mxu0 0.0
    %989 = vmatpush1.msra.mxu0 0.0
    %990 = vmatprep.subr.mxu0 0.0
    %991 = vmatpush1.msra.mxu0 0.0
    %992 = vmatprep.subr.mxu0 0.0
    %993 = vmatpush1.msra.mxu0 0.0
    %994 = vmatprep.subr.mxu0 0.0
    %995 = vmatpush1.msra.mxu0 0.0
    %996 = vmatprep.subr.mxu0 0.0
    %997 = vmatpush1.msra.mxu0 0.0
    %998 = vmatprep.subr.mxu0 0.0
    %999 = vmatpush1.msra.mxu0 0.0
    %1000 = vmatprep.subr.mxu0 0.0
    %1001 = vmatpush1.msra.mxu0 0.0
    %1002 = vmatprep.mubr.f32.mxu0 0.0
    %v1003 = vand.u32 %v268, 4294901760
    %1004 = vmatmul.mubr.f32.gmra.mrb[0].mxu0 %v1003
    %v1005 = vpop.f32.mrb[0].mxu0
    %v1006 = vadd.f32 %v891, %v1005
    %v1007 = vpop.f32.mrb[0].mxu0
    %1008 = vmatprep.mubr.f32.mxu0 0.0
    %v1009 = vand.u32 %v271, 4294901760
    %1010 = vmatmul.mubr.f32.gmra.mrb[0].mxu0 %v1009
    %v1011 = vpop.f32.mrb[0].mxu0
    %v1012 = vadd.f32 %v897, %v1011
    %v1013 = vpop.f32.mrb[0].mxu0
    %1014 = vmatprep.mubr.f32.mxu0 0.0
    %v1015 = vand.u32 %v274, 4294901760
    %1016 = vmatmul.mubr.f32.gmra.mrb[0].mxu0 %v1015
    %v1017 = vpop.f32.mrb[0].mxu0
    %v1018 = vadd.f32 %v903, %v1017
    %v1019 = vpop.f32.mrb[0].mxu0
    %1020 = vmatprep.mubr.f32.mxu0 0.0
    %v1021 = vand.u32 %v277, 4294901760
    %1022 = vmatmul.mubr.f32.gmra.mrb[0].mxu0 %v1021
    %v1023 = vpop.f32.mrb[0].mxu0
    %v1024 = vadd.f32 %v909, %v1023
    %v1025 = vpop.f32.mrb[0].mxu0
    %1026 = vmatprep.mubr.f32.mxu0 0.0
    %v1027 = vand.u32 %v280, 4294901760
    %1028 = vmatmul.mubr.f32.gmra.mrb[0].mxu0 %v1027
    %v1029 = vpop.f32.mrb[0].mxu0
    %v1030 = vadd.f32 %v915, %v1029
    %v1031 = vpop.f32.mrb[0].mxu0
    %1032 = vmatprep.mubr.f32.mxu0 0.0
    %v1033 = vand.u32 %v283, 4294901760
    %1034 = vmatmul.mubr.f32.gmra.mrb[0].mxu0 %v1033
    %v1035 = vpop.f32.mrb[0].mxu0
    %v1036 = vadd.f32 %v921, %v1035
    %v1037 = vpop.f32.mrb[0].mxu0
    %1038 = vmatprep.mubr.f32.mxu0 0.0
    %v1039 = vand.u32 %v286, 4294901760
    %1040 = vmatmul.mubr.f32.gmra.mrb[0].mxu0 %v1039
    %v1041 = vpop.f32.mrb[0].mxu0
    %v1042 = vadd.f32 %v927, %v1041
    %v1043 = vpop.f32.mrb[0].mxu0
    %1044 = vmatprep.mubr.f32.mxu0 0.0
    %v1045 = vand.u32 %v289, 4294901760
    %1046 = vmatmul.mubr.f32.gmra.mrb[0].mxu0 %v1045
    %v1047 = vpop.f32.mrb[0].mxu0
    %v1048 = vadd.f32 %v933, %v1047
    %v1049 = vpop.f32.mrb[0].mxu0
    %1050 = vdwg.mxu0
    %v1051 = vmul.f32 %v1006, %v1006
    %v1052 = vmul.f32 %v1012, %v1012
    %v1053 = vmul.f32 %v1018, %v1018
    %v1054 = vmul.f32 %v1024, %v1024
    %v1055 = vmul.f32 %v1030, %v1030
    %v1056 = vmul.f32 %v1036, %v1036
    %v1057 = vmul.f32 %v1042, %v1042
    %v1058 = vmul.f32 %v1048, %v1048
    %1059 = vadd.xlane.f32.xlu0 %v1051
    %v1060 = vpop.xlane.xlu0 %1059
    %1061 = vadd.xlane.f32.xlu0 %v1052
    %v1062 = vpop.xlane.xlu0 %1061
    %1063 = vadd.xlane.f32.xlu0 %v1053
    %v1064 = vpop.xlane.xlu0 %1063
    %1065 = vadd.xlane.f32.xlu0 %v1054
    %v1066 = vpop.xlane.xlu0 %1065
    %1067 = vadd.xlane.f32.xlu0 %v1055
    %v1068 = vpop.xlane.xlu0 %1067
    %1069 = vadd.xlane.f32.xlu0 %v1056
    %v1070 = vpop.xlane.xlu0 %1069
    %1071 = vadd.xlane.f32.xlu0 %v1057
    %v1072 = vpop.xlane.xlu0 %1071
    %1073 = vadd.xlane.f32.xlu0 %v1058
    %v1074 = vpop.xlane.xlu0 %1073
    %v1075 = vadd.f32 %v1060, 1e-07
    %v1076 = vadd.f32 %v1062, 1e-07
    %v1077 = vadd.f32 %v1064, 1e-07
    %v1078 = vadd.f32 %v1066, 1e-07
    %v1079 = vadd.f32 %v1068, 1e-07
    %v1080 = vadd.f32 %v1070, 1e-07
    %v1081 = vadd.f32 %v1072, 1e-07
    %v1082 = vadd.f32 %v1074, 1e-07
    %v1083 = vmax.f32 %v1075, 1e-06
    %v1084 = vmax.f32 %v1076, 1e-06
    %v1085 = vmax.f32 %v1077, 1e-06
    %v1086 = vmax.f32 %v1078, 1e-06
    %v1087 = vmax.f32 %v1079, 1e-06
    %v1088 = vmax.f32 %v1080, 1e-06
    %v1089 = vmax.f32 %v1081, 1e-06
    %v1090 = vmax.f32 %v1082, 1e-06
    %v1091 = vrsqrt.pop %v1083
    %v1092 = vmul.f32 %v1083, %v1091
    %vm1093 = vcmp.eq.f32.partialorder %v1083, inf
    %v1094 = vsel %vm1093, %v1083, %v1092
    %vm1095 = vcmp.eq.f32.partialorder %v1083, 0.0
    %v1096 = vand.u32 %v1083, 2147483648
    %v1097 = vsel %vm1095, %v1096, %v1094
    %v1098 = vrsqrt.pop %v1084
    %v1099 = vmul.f32 %v1084, %v1098
    %vm1100 = vcmp.eq.f32.partialorder %v1084, inf
    %v1101 = vsel %vm1100, %v1084, %v1099
    %vm1102 = vcmp.eq.f32.partialorder %v1084, 0.0
    %v1103 = vand.u32 %v1084, 2147483648
    %v1104 = vsel %vm1102, %v1103, %v1101
    %v1105 = vrsqrt.pop %v1085
    %v1106 = vmul.f32 %v1085, %v1105
    %vm1107 = vcmp.eq.f32.partialorder %v1085, inf
    %v1108 = vsel %vm1107, %v1085, %v1106
    %vm1109 = vcmp.eq.f32.partialorder %v1085, 0.0
    %v1110 = vand.u32 %v1085, 2147483648
    %v1111 = vsel %vm1109, %v1110, %v1108
    %v1112 = vrsqrt.pop %v1086
    %v1113 = vmul.f32 %v1086, %v1112
    %vm1114 = vcmp.eq.f32.partialorder %v1086, inf
    %v1115 = vsel %vm1114, %v1086, %v1113
    %vm1116 = vcmp.eq.f32.partialorder %v1086, 0.0
    %v1117 = vand.u32 %v1086, 2147483648
    %v1118 = vsel %vm1116, %v1117, %v1115
    %v1119 = vrsqrt.pop %v1087
    %v1120 = vmul.f32 %v1087, %v1119
    %vm1121 = vcmp.eq.f32.partialorder %v1087, inf
    %v1122 = vsel %vm1121, %v1087, %v1120
    %vm1123 = vcmp.eq.f32.partialorder %v1087, 0.0
    %v1124 = vand.u32 %v1087, 2147483648
    %v1125 = vsel %vm1123, %v1124, %v1122
    %v1126 = vrsqrt.pop %v1088
    %v1127 = vmul.f32 %v1088, %v1126
    %vm1128 = vcmp.eq.f32.partialorder %v1088, inf
    %v1129 = vsel %vm1128, %v1088, %v1127
    %vm1130 = vcmp.eq.f32.partialorder %v1088, 0.0
    %v1131 = vand.u32 %v1088, 2147483648
    %v1132 = vsel %vm1130, %v1131, %v1129
    %v1133 = vrsqrt.pop %v1089
    %v1134 = vmul.f32 %v1089, %v1133
    %vm1135 = vcmp.eq.f32.partialorder %v1089, inf
    %v1136 = vsel %vm1135, %v1089, %v1134
    %vm1137 = vcmp.eq.f32.partialorder %v1089, 0.0
    %v1138 = vand.u32 %v1089, 2147483648
    %v1139 = vsel %vm1137, %v1138, %v1136
    %v1140 = vrsqrt.pop %v1090
    %v1141 = vmul.f32 %v1090, %v1140
    %vm1142 = vcmp.eq.f32.partialorder %v1090, inf
    %v1143 = vsel %vm1142, %v1090, %v1141
    %vm1144 = vcmp.eq.f32.partialorder %v1090, 0.0
    %v1145 = vand.u32 %v1090, 2147483648
    %v1146 = vsel %vm1144, %v1145, %v1143
    %v1147 = vrsqrt.pop %v1083
    %v1148 = vrsqrt.pop %v1084
    %v1149 = vrsqrt.pop %v1085
    %v1150 = vrsqrt.pop %v1086
    %v1151 = vrsqrt.pop %v1087
    %v1152 = vrsqrt.pop %v1088
    %v1153 = vrsqrt.pop %v1089
    %v1154 = vrsqrt.pop %v1090
    %v1155 = vmin.f32 %v1097, 50.0
    %v1156 = vmin.f32 %v1104, 50.0
    %v1157 = vmin.f32 %v1111, 50.0
    %v1158 = vmin.f32 %v1118, 50.0
    %v1159 = vmin.f32 %v1125, 50.0
    %v1160 = vmin.f32 %v1132, 50.0
    %v1161 = vmin.f32 %v1139, 50.0
    %v1162 = vmin.f32 %v1146, 50.0
    %v1163 = vmul.f32 %v1155, 1.442695
    %v1164 = vpow.pop %v1163
    %v1165 = vmul.f32 %v1156, 1.442695
    %v1166 = vpow.pop %v1165
    %v1167 = vmul.f32 %v1157, 1.442695
    %v1168 = vpow.pop %v1167
    %v1169 = vmul.f32 %v1158, 1.442695
    %v1170 = vpow.pop %v1169
    %v1171 = vmul.f32 %v1159, 1.442695
    %v1172 = vpow.pop %v1171
    %v1173 = vmul.f32 %v1160, 1.442695
    %v1174 = vpow.pop %v1173
    %v1175 = vmul.f32 %v1161, 1.442695
    %v1176 = vpow.pop %v1175
    %v1177 = vmul.f32 %v1162, 1.442695
    %v1178 = vpow.pop %v1177
    %v1179 = vsub.f32 0.0, %v1155
    %v1180 = vsub.f32 0.0, %v1156
    %v1181 = vsub.f32 0.0, %v1157
    %v1182 = vsub.f32 0.0, %v1158
    %v1183 = vsub.f32 0.0, %v1159
    %v1184 = vsub.f32 0.0, %v1160
    %v1185 = vsub.f32 0.0, %v1161
    %v1186 = vsub.f32 0.0, %v1162
    %v1187 = vmul.f32 %v1179, 1.442695
    %v1188 = vpow.pop %v1187
    %v1189 = vmul.f32 %v1180, 1.442695
    %v1190 = vpow.pop %v1189
    %v1191 = vmul.f32 %v1181, 1.442695
    %v1192 = vpow.pop %v1191
    %v1193 = vmul.f32 %v1182, 1.442695
    %v1194 = vpow.pop %v1193
    %v1195 = vmul.f32 %v1183, 1.442695
    %v1196 = vpow.pop %v1195
    %v1197 = vmul.f32 %v1184, 1.442695
    %v1198 = vpow.pop %v1197
    %v1199 = vmul.f32 %v1185, 1.442695
    %v1200 = vpow.pop %v1199
    %v1201 = vmul.f32 %v1186, 1.442695
    %v1202 = vpow.pop %v1201
    %v1203 = vsub.f32 %v1164, %v1188
    %v1204 = vsub.f32 %v1166, %v1190
    %v1205 = vsub.f32 %v1168, %v1192
    %v1206 = vsub.f32 %v1170, %v1194
    %v1207 = vsub.f32 %v1172, %v1196
    %v1208 = vsub.f32 %v1174, %v1198
    %v1209 = vsub.f32 %v1176, %v1200
    %v1210 = vsub.f32 %v1178, %v1202
    %v1211 = vmul.f32 %v1203, 0.5
    %v1212 = vmul.f32 %v1204, 0.5
    %v1213 = vmul.f32 %v1205, 0.5
    %v1214 = vmul.f32 %v1206, 0.5
    %v1215 = vmul.f32 %v1207, 0.5
    %v1216 = vmul.f32 %v1208, 0.5
    %v1217 = vmul.f32 %v1209, 0.5
    %v1218 = vmul.f32 %v1210, 0.5
    %v1219 = vmul.f32 %v1211, %v1147
    %v1220 = vmul.f32 %v1212, %v1148
    %v1221 = vmul.f32 %v1213, %v1149
    %v1222 = vmul.f32 %v1214, %v1150
    %v1223 = vmul.f32 %v1215, %v1151
    %v1224 = vmul.f32 %v1216, %v1152
    %v1225 = vmul.f32 %v1217, %v1153
    %v1226 = vmul.f32 %v1218, %v1154
    %v1227 = vrsqrt.pop %v1060
    %v1228 = vmul.f32 %v1060, %v1227
    %vm1229 = vcmp.eq.f32.partialorder %v1060, inf
    %v1230 = vsel %vm1229, %v1060, %v1228
    %vm1231 = vcmp.eq.f32.partialorder %v1060, 0.0
    %v1232 = vand.u32 %v1060, 2147483648
    %v1233 = vsel %vm1231, %v1232, %v1230
    %v1234 = vrsqrt.pop %v1062
    %v1235 = vmul.f32 %v1062, %v1234
    %vm1236 = vcmp.eq.f32.partialorder %v1062, inf
    %v1237 = vsel %vm1236, %v1062, %v1235
    %vm1238 = vcmp.eq.f32.partialorder %v1062, 0.0
    %v1239 = vand.u32 %v1062, 2147483648
    %v1240 = vsel %vm1238, %v1239, %v1237
    %v1241 = vrsqrt.pop %v1064
    %v1242 = vmul.f32 %v1064, %v1241
    %vm1243 = vcmp.eq.f32.partialorder %v1064, inf
    %v1244 = vsel %vm1243, %v1064, %v1242
    %vm1245 = vcmp.eq.f32.partialorder %v1064, 0.0
    %v1246 = vand.u32 %v1064, 2147483648
    %v1247 = vsel %vm1245, %v1246, %v1244
    %v1248 = vrsqrt.pop %v1066
    %v1249 = vmul.f32 %v1066, %v1248
    %vm1250 = vcmp.eq.f32.partialorder %v1066, inf
    %v1251 = vsel %vm1250, %v1066, %v1249
    %vm1252 = vcmp.eq.f32.partialorder %v1066, 0.0
    %v1253 = vand.u32 %v1066, 2147483648
    %v1254 = vsel %vm1252, %v1253, %v1251
    %v1255 = vrsqrt.pop %v1068
    %v1256 = vmul.f32 %v1068, %v1255
    %vm1257 = vcmp.eq.f32.partialorder %v1068, inf
    %v1258 = vsel %vm1257, %v1068, %v1256
    %vm1259 = vcmp.eq.f32.partialorder %v1068, 0.0
    %v1260 = vand.u32 %v1068, 2147483648
    %v1261 = vsel %vm1259, %v1260, %v1258
    %v1262 = vrsqrt.pop %v1070
    %v1263 = vmul.f32 %v1070, %v1262
    %vm1264 = vcmp.eq.f32.partialorder %v1070, inf
    %v1265 = vsel %vm1264, %v1070, %v1263
    %vm1266 = vcmp.eq.f32.partialorder %v1070, 0.0
    %v1267 = vand.u32 %v1070, 2147483648
    %v1268 = vsel %vm1266, %v1267, %v1265
    %v1269 = vrsqrt.pop %v1072
    %v1270 = vmul.f32 %v1072, %v1269
    %vm1271 = vcmp.eq.f32.partialorder %v1072, inf
    %v1272 = vsel %vm1271, %v1072, %v1270
    %vm1273 = vcmp.eq.f32.partialorder %v1072, 0.0
    %v1274 = vand.u32 %v1072, 2147483648
    %v1275 = vsel %vm1273, %v1274, %v1272
    %v1276 = vrsqrt.pop %v1074
    %v1277 = vmul.f32 %v1074, %v1276
    %vm1278 = vcmp.eq.f32.partialorder %v1074, inf
    %v1279 = vsel %vm1278, %v1074, %v1277
    %vm1280 = vcmp.eq.f32.partialorder %v1074, 0.0
    %v1281 = vand.u32 %v1074, 2147483648
    %v1282 = vsel %vm1280, %v1281, %v1279
    %v1283 = vmul.f32 %v1219, %v1233
    %v1284 = vmul.f32 %v1220, %v1240
    %v1285 = vmul.f32 %v1221, %v1247
    %v1286 = vmul.f32 %v1222, %v1254
    %v1287 = vmul.f32 %v1223, %v1261
    %v1288 = vmul.f32 %v1224, %v1268
    %v1289 = vmul.f32 %v1225, %v1275
    %v1290 = vmul.f32 %v1226, %v1282
    %vm1291 = vcmp.gt.f32.partialorder %v1283, 1000.0
    %vm1292 = vcmp.gt.f32.partialorder %v1284, 1000.0
    %vm1293 = vcmp.gt.f32.partialorder %v1285, 1000.0
    %vm1294 = vcmp.gt.f32.partialorder %v1286, 1000.0
    %vm1295 = vcmp.gt.f32.partialorder %v1287, 1000.0
    %vm1296 = vcmp.gt.f32.partialorder %v1288, 1000.0
    %vm1297 = vcmp.gt.f32.partialorder %v1289, 1000.0
    %vm1298 = vcmp.gt.f32.partialorder %v1290, 1000.0
    %v1299 = vadd.f32 %v1283, 1e-07
    %v1300 = vadd.f32 %v1284, 1e-07
    %v1301 = vadd.f32 %v1285, 1e-07
    %v1302 = vadd.f32 %v1286, 1e-07
    %v1303 = vadd.f32 %v1287, 1e-07
    %v1304 = vadd.f32 %v1288, 1e-07
    %v1305 = vadd.f32 %v1289, 1e-07
    %v1306 = vadd.f32 %v1290, 1e-07
    %v1307 = vrcp.pop %v1299
    %v1308 = vmul.f32 1000.0, %v1307
    %v1309 = vrcp.pop %v1300
    %v1310 = vmul.f32 1000.0, %v1309
    %v1311 = vrcp.pop %v1301
    %v1312 = vmul.f32 1000.0, %v1311
    %v1313 = vrcp.pop %v1302
    %v1314 = vmul.f32 1000.0, %v1313
    %v1315 = vrcp.pop %v1303
    %v1316 = vmul.f32 1000.0, %v1315
    %v1317 = vrcp.pop %v1304
    %v1318 = vmul.f32 1000.0, %v1317
    %v1319 = vrcp.pop %v1305
    %v1320 = vmul.f32 1000.0, %v1319
    %v1321 = vrcp.pop %v1306
    %v1322 = vmul.f32 1000.0, %v1321
    %v1323 = vsel %vm1291, %v1308, 1.0
    %v1324 = vsel %vm1292, %v1310, 1.0
    %v1325 = vsel %vm1293, %v1312, 1.0
    %v1326 = vsel %vm1294, %v1314, 1.0
    %v1327 = vsel %vm1295, %v1316, 1.0
    %v1328 = vsel %vm1296, %v1318, 1.0
    %v1329 = vsel %vm1297, %v1320, 1.0
    %v1330 = vsel %vm1298, %v1322, 1.0
    %v1331 = vmul.f32 %v1283, %v1323
    %v1332 = vmul.f32 %v1284, %v1324
    %v1333 = vmul.f32 %v1285, %v1325
    %v1334 = vmul.f32 %v1286, %v1326
    %v1335 = vmul.f32 %v1287, %v1327
    %v1336 = vmul.f32 %v1288, %v1328
    %v1337 = vmul.f32 %v1289, %v1329
    %v1338 = vmul.f32 %v1290, %v1330
    %v1339 = vmul.f32 %v1331, %v1331
    %v1340 = vmul.f32 %v1332, %v1332
    %v1341 = vmul.f32 %v1333, %v1333
    %v1342 = vmul.f32 %v1334, %v1334
    %v1343 = vmul.f32 %v1335, %v1335
    %v1344 = vmul.f32 %v1336, %v1336
    %v1345 = vmul.f32 %v1337, %v1337
    %v1346 = vmul.f32 %v1338, %v1338
    %v1347 = vadd.f32 %v1339, 1.0
    %v1348 = vadd.f32 %v1340, 1.0
    %v1349 = vadd.f32 %v1341, 1.0
    %v1350 = vadd.f32 %v1342, 1.0
    %v1351 = vadd.f32 %v1343, 1.0
    %v1352 = vadd.f32 %v1344, 1.0
    %v1353 = vadd.f32 %v1345, 1.0
    %v1354 = vadd.f32 %v1346, 1.0
    %v1355 = vrsqrt.pop %v1347
    %v1356 = vmul.f32 %v1347, %v1355
    %vm1357 = vcmp.eq.f32.partialorder %v1347, inf
    %v1358 = vsel %vm1357, %v1347, %v1356
    %vm1359 = vcmp.eq.f32.partialorder %v1347, 0.0
    %v1360 = vand.u32 %v1347, 2147483648
    %v1361 = vsel %vm1359, %v1360, %v1358
    %v1362 = vrsqrt.pop %v1348
    %v1363 = vmul.f32 %v1348, %v1362
    %vm1364 = vcmp.eq.f32.partialorder %v1348, inf
    %v1365 = vsel %vm1364, %v1348, %v1363
    %vm1366 = vcmp.eq.f32.partialorder %v1348, 0.0
    %v1367 = vand.u32 %v1348, 2147483648
    %v1368 = vsel %vm1366, %v1367, %v1365
    %v1369 = vrsqrt.pop %v1349
    %v1370 = vmul.f32 %v1349, %v1369
    %vm1371 = vcmp.eq.f32.partialorder %v1349, inf
    %v1372 = vsel %vm1371, %v1349, %v1370
    %vm1373 = vcmp.eq.f32.partialorder %v1349, 0.0
    %v1374 = vand.u32 %v1349, 2147483648
    %v1375 = vsel %vm1373, %v1374, %v1372
    %v1376 = vrsqrt.pop %v1350
    %v1377 = vmul.f32 %v1350, %v1376
    %vm1378 = vcmp.eq.f32.partialorder %v1350, inf
    %v1379 = vsel %vm1378, %v1350, %v1377
    %vm1380 = vcmp.eq.f32.partialorder %v1350, 0.0
    %v1381 = vand.u32 %v1350, 2147483648
    %v1382 = vsel %vm1380, %v1381, %v1379
    %v1383 = vrsqrt.pop %v1351
    %v1384 = vmul.f32 %v1351, %v1383
    %vm1385 = vcmp.eq.f32.partialorder %v1351, inf
    %v1386 = vsel %vm1385, %v1351, %v1384
    %vm1387 = vcmp.eq.f32.partialorder %v1351, 0.0
    %v1388 = vand.u32 %v1351, 2147483648
    %v1389 = vsel %vm1387, %v1388, %v1386
    %v1390 = vrsqrt.pop %v1352
    %v1391 = vmul.f32 %v1352, %v1390
    %vm1392 = vcmp.eq.f32.partialorder %v1352, inf
    %v1393 = vsel %vm1392, %v1352, %v1391
    %vm1394 = vcmp.eq.f32.partialorder %v1352, 0.0
    %v1395 = vand.u32 %v1352, 2147483648
    %v1396 = vsel %vm1394, %v1395, %v1393
    %v1397 = vrsqrt.pop %v1353
    %v1398 = vmul.f32 %v1353, %v1397
    %vm1399 = vcmp.eq.f32.partialorder %v1353, inf
    %v1400 = vsel %vm1399, %v1353, %v1398
    %vm1401 = vcmp.eq.f32.partialorder %v1353, 0.0
    %v1402 = vand.u32 %v1353, 2147483648
    %v1403 = vsel %vm1401, %v1402, %v1400
    %v1404 = vrsqrt.pop %v1354
    %v1405 = vmul.f32 %v1354, %v1404
    %vm1406 = vcmp.eq.f32.partialorder %v1354, inf
    %v1407 = vsel %vm1406, %v1354, %v1405
    %vm1408 = vcmp.eq.f32.partialorder %v1354, 0.0
    %v1409 = vand.u32 %v1354, 2147483648
    %v1410 = vsel %vm1408, %v1409, %v1407
    %v1411 = vlaneseq
    %v1412 = vand.u32 %v1411, 127
    %vm1413 = vcmp.eq.s32.totalorder %v1412, 0
    %v1414 = vmul.f32 %v1219, %v1323
    %v1415 = vmul.f32 %v1220, %v1324
    %v1416 = vmul.f32 %v1221, %v1325
    %v1417 = vmul.f32 %v1222, %v1326
    %v1418 = vmul.f32 %v1223, %v1327
    %v1419 = vmul.f32 %v1224, %v1328
    %v1420 = vmul.f32 %v1225, %v1329
    %v1421 = vmul.f32 %v1226, %v1330
    %v1422 = vmul.f32 %v1414, %v1006
    %v1423 = vmul.f32 %v1415, %v1012
    %v1424 = vmul.f32 %v1416, %v1018
    %v1425 = vmul.f32 %v1417, %v1024
    %v1426 = vmul.f32 %v1418, %v1030
    %v1427 = vmul.f32 %v1419, %v1036
    %v1428 = vmul.f32 %v1420, %v1042
    %v1429 = vmul.f32 %v1421, %v1048
    %v1430 = vsel %vm1413, 1, 0
    %vm1431 = vcmp.eq.s32.totalorder %v1430, 1
    %v1432 = vsel %vm1431, %v1361, %v1422
    %v1433 = vsel %vm1431, %v1368, %v1423
    %v1434 = vsel %vm1431, %v1375, %v1424
    %v1435 = vsel %vm1431, %v1382, %v1425
    %v1436 = vsel %vm1431, %v1389, %v1426
    %v1437 = vsel %vm1431, %v1396, %v1427
    %v1438 = vsel %vm1431, %v1403, %v1428
    %v1439 = vsel %vm1431, %v1410, %v1429
    %v1440 = vand.u32 2147483647, %v1006
    %v1441 = vand.u32 2147483647, %v1012
    %v1442 = vand.u32 2147483647, %v1018
    %v1443 = vand.u32 2147483647, %v1024
    %v1444 = vand.u32 2147483647, %v1030
    %v1445 = vand.u32 2147483647, %v1036
    %v1446 = vand.u32 2147483647, %v1042
    %v1447 = vand.u32 2147483647, %v1048
    %1448 = vadd.xlane.f32.xlu0 %v1440
    %v1449 = vpop.xlane.xlu0 %1448
    %1450 = vadd.xlane.f32.xlu0 %v1441
    %v1451 = vpop.xlane.xlu0 %1450
    %1452 = vadd.xlane.f32.xlu0 %v1442
    %v1453 = vpop.xlane.xlu0 %1452
    %1454 = vadd.xlane.f32.xlu0 %v1443
    %v1455 = vpop.xlane.xlu0 %1454
    %1456 = vadd.xlane.f32.xlu0 %v1444
    %v1457 = vpop.xlane.xlu0 %1456
    %1458 = vadd.xlane.f32.xlu0 %v1445
    %v1459 = vpop.xlane.xlu0 %1458
    %1460 = vadd.xlane.f32.xlu0 %v1446
    %v1461 = vpop.xlane.xlu0 %1460
    %1462 = vadd.xlane.f32.xlu0 %v1447
    %v1463 = vpop.xlane.xlu0 %1462
    %vm1464 = vcmp.gt.f32.partialorder %v1449, 0.0
    %vm1465 = vcmp.gt.f32.partialorder %v1451, 0.0
    %vm1466 = vcmp.gt.f32.partialorder %v1453, 0.0
    %vm1467 = vcmp.gt.f32.partialorder %v1455, 0.0
    %vm1468 = vcmp.gt.f32.partialorder %v1457, 0.0
    %vm1469 = vcmp.gt.f32.partialorder %v1459, 0.0
    %vm1470 = vcmp.gt.f32.partialorder %v1461, 0.0
    %vm1471 = vcmp.gt.f32.partialorder %v1463, 0.0
    %v1472 = vsel %vm1464, 1, 0
    %v1473 = vsel %vm1465, 1, 0
    %v1474 = vsel %vm1466, 1, 0
    %v1475 = vsel %vm1467, 1, 0
    %v1476 = vsel %vm1468, 1, 0
    %v1477 = vsel %vm1469, 1, 0
    %v1478 = vsel %vm1470, 1, 0
    %v1479 = vsel %vm1471, 1, 0
    %vm1480 = vcmp.eq.s32.totalorder %v1472, 1
    %vm1481 = vcmp.eq.s32.totalorder %v1473, 1
    %vm1482 = vcmp.eq.s32.totalorder %v1474, 1
    %vm1483 = vcmp.eq.s32.totalorder %v1475, 1
    %vm1484 = vcmp.eq.s32.totalorder %v1476, 1
    %vm1485 = vcmp.eq.s32.totalorder %v1477, 1
    %vm1486 = vcmp.eq.s32.totalorder %v1478, 1
    %vm1487 = vcmp.eq.s32.totalorder %v1479, 1
    %v1488 = vsel %vm1480, %v1432, 0.0
    %v1489 = vsel %vm1481, %v1433, 0.0
    %v1490 = vsel %vm1482, %v1434, 0.0
    %v1491 = vsel %vm1483, %v1435, 0.0
    %v1492 = vsel %vm1484, %v1436, 0.0
    %v1493 = vsel %vm1485, %v1437, 0.0
    %v1494 = vsel %vm1486, %v1438, 0.0
    %v1495 = vsel %vm1487, %v1439, 0.0
    %1496 = vst [vmem:[#allocation2] sm:$0xff] %v1488
    %1497 = vst [vmem:[#allocation2 + $0x8] sm:$0xff] %v1489
    %1498 = vst [vmem:[#allocation2 + $0x10] sm:$0xff] %v1490
    %1499 = vst [vmem:[#allocation2 + $0x18] sm:$0xff] %v1491
    %1500 = vst [vmem:[#allocation2 + $0x20] sm:$0xff] %v1492
    %1501 = vst [vmem:[#allocation2 + $0x28] sm:$0xff] %v1493
    %1502 = vst [vmem:[#allocation2 + $0x30] sm:$0xff] %v1494
    %1503 = vst [vmem:[#allocation2 + $0x38] sm:$0xff] %v1495
    // Predicated region
    $region18: #{tpu_custom_call.1} parent=1 // pred_check
      _
    $region19: #{tpu_custom_call.1} parent=1 // pred_check_branch
      %1505 = sbr.rel (0) target = $region21
    $region20: #{tpu_custom_call.1} parent=1 // pred_region
      %s1507 = ssub.s32 1024, 1024
      %1508 = vsyncadd [#allocation3], %s1507
      %s1509 = sshll.u32 [#allocation2], 4
      %s1510 = int_to_ptr.vmem [resolvable:$true] %s1509
      %1515 = dma.vmem_to_hbm [thread:$0]  %s1510, 1024, %s4, [#allocation3], 128, 128, 8
    $region21: #{tpu_custom_call.1} parent=1 // pred_fallthru
      _
    // Predicated region
    $region22: #{tpu_custom_call.1} parent=1 // pred_check
      _
    $region23: #{tpu_custom_call.1} parent=1 // pred_check_branch
      %1517 = sbr.rel (0) target = $region25
    $region24: #{tpu_custom_call.1} parent=1 // pred_region
      %1518 = dma.done [#allocation3], 1024
    $region25: #{tpu_custom_call.1} parent=1 // pred_fallthru
      _
    %1519 = vsyncpa [#allocation3], 1

</llo_original>
